<compile_context>
chip_gen: v7x
topology: tpu7x:2x2x1
jax: 0.10.0
libtpu: 0.0.40
codegen_flags: <defaults>
</compile_context>

<pallas_src>
import functools

import jax
import jax.numpy as jnp
from jax import lax
from jax.experimental import pallas as pl
from jax.experimental.pallas import tpu as pltpu


def _act(name):
    return jnp.tanh if name == "tanh" else (lambda z: jnp.maximum(z, 0.0))


def _round_up(n, m):
    return ((n + m - 1) // m) * m


_UNROLL_SEQ_LIMIT = 32  # full static unroll of the time loop up to this S


def _rnn_kernel(*refs, seq_length, num_layers, act_type):
    if num_layers > 1:
        x_ref, wih0_ref, wihr_ref, whh_ref, b_ref, o_ref, xw_scr = refs
    else:
        x_ref, wih0_ref, whh_ref, b_ref, o_ref = refs
        wihr_ref = None
        xw_scr = None

    act = _act(act_type)
    S = seq_length
    Bb = o_ref.shape[1]       # padded batch tile  (multiple of 8   -> sublanes)
    Hp = o_ref.shape[2]       # padded hidden size (multiple of 128 -> lanes)
    cdt = jnp.bfloat16        # MXU-native matmul operand dtype (f32 accumulate)

    def run_layer(get_xw, w_rec):
        """Serial recurrence for one layer. get_xw(t) -> (Bb, Hp) f32 input drive."""
        h = act(get_xw(0))                       # t == 0: zero initial hidden state
        o_ref[0] = h

        def step(t, h):
            h = act(get_xw(t) + jnp.dot(h.astype(cdt), w_rec,
                                        preferred_element_type=jnp.float32))
            o_ref[t] = h
            return h

        if S <= _UNROLL_SEQ_LIMIT:
            # Short sequences: full static unroll, h lives entirely in vregs.
            for t in range(1, S):
                h = step(t, h)
        else:
            # Long sequences: bounded live ranges, chunked unroll keeps LLO visibility.
            h = lax.fori_loop(1, S, step, h, unroll=8)
        return h

    # ---------------- layer 0 ----------------
    # OneToMany: the input is identical at every timestep, so its projection
    # (plus the folded b_ih + b_hh) is computed exactly once and reused.
    xw0 = jnp.dot(x_ref[...].astype(cdt), wih0_ref[...],
                  preferred_element_type=jnp.float32) + b_ref[0]
    # NOTE: the (Hp, Hp) recurrent RHS is loop-invariant across the time loop, so
    # Mosaic can keep it staged in the MXU weight registers; explicit
    # pltpu.matmul_push_rhs / matmul_acc_lhs staging is intentionally not used.
    run_layer(lambda t: xw0, whh_ref[0])

    # ---------------- layers 1 .. L-1 ----------------
    # Chunk size for the hoisted whole-sequence input projection: keep each LHS
    # around a few hundred rows so the matmul stays throughput-bound without
    # materializing the full (S, Bb, Hp) activation as a single SSA value.
    tchunk = max(1, min(S, max(1, 512 // Bb)))
    for l in range(1, num_layers):
        w_in = wihr_ref[l - 1]                   # (Hp, Hp) bf16
        b_l = b_ref[l]                           # (1, Hp)  f32
        # Whole-sequence projection of layer l-1's outputs, hoisted out of the time
        # loop and written chunkwise into VMEM scratch.
        for t0 in range(0, S, tchunk):
            c = min(tchunk, S - t0)
            prev = o_ref[t0:t0 + c].reshape(c * Bb, Hp).astype(cdt)
            xw_scr[t0:t0 + c] = (
                jnp.dot(prev, w_in, preferred_element_type=jnp.float32) + b_l
            ).reshape(c, Bb, Hp)
        # o_ref is overwritten in place; safe because xw_scr is fully materialized.
        run_layer(lambda t: xw_scr[t], whh_ref[l])


def _physical_vmem_bytes():
    try:
        return int(pltpu.get_tpu_info().vmem_capacity_bytes)
    except Exception:
        return 64 * 1024 * 1024   # conservative fallback (v7x per-core VMEM)


def _is_multi_tensorcore_chip():
    try:
        kind = jax.devices()[0].device_kind.lower()
    except Exception:
        return False
    return "v7" in kind           # v5e / v6e are single-TC; only split on v7x


def one_to_many_forward(x, params, weights):
    """x: (B, input_size) or (B, 1, input_size). Returns (B, seq_length, hidden_size)."""
    if x.ndim == 3:
        assert x.shape[1] == 1
        x = x[:, 0, :]
    B, I = x.shape
    H = params["hidden_size"]
    S = params["seq_length"]
    L = params["num_rec_layers"]
    assert I == params["input_size"]

    w_ih0, w_ih_rest, w_hh, b_ih, b_hh = weights

    # Pad to hardware tiles: last dim (lanes) -> multiple of 128, batch (sublanes) -> 8.
    Hp = _round_up(H, 128)
    Bp = _round_up(B, 8)
    f32 = jnp.float32
    bf16 = jnp.bfloat16

    xp = jnp.zeros((Bp, I), f32).at[:B].set(x.astype(f32))
    # Weights padded then pre-cast to bf16 (MXU-native); accumulation stays f32
    # via preferred_element_type inside the kernel. Biases stay f32.
    wih0p = jnp.zeros((I, Hp), f32).at[:, :H].set(w_ih0.astype(f32)).astype(bf16)
    whhp = jnp.zeros((L, Hp, Hp), f32).at[:, :H, :H].set(w_hh.astype(f32)).astype(bf16)
    # Fold both biases into a single per-layer vector (added once per hoisted projection).
    bp = jnp.zeros((L, 1, Hp), f32).at[:, :, :H].set((b_ih + b_hh).astype(f32))

    args = [xp, wih0p]
    if L > 1:
        wihrp = jnp.zeros((L - 1, Hp, Hp), f32).at[:, :H, :H].set(
            w_ih_rest.astype(f32)).astype(bf16)
        args.append(wihrp)
    args += [whhp, bp]

    # Batch tiling: only split across grid tiles on 2-TensorCore chips (v7x), and
    # only when each half still fills the MXU rows (>= 128). On single-TC v5e/v6e a
    # split would just execute the latency-bound serial chain twice.
    nb, BB = 1, Bp
    if _is_multi_tensorcore_chip() and Bp >= 256 and (Bp // 2) % 8 == 0:
        BB = Bp // 2
        nb = 2

    single_buf = pl.Buffered(1)

    def invariant_spec(shape):
        # Grid-invariant block: constant index_map + single-buffered (halves VMEM).
        return pl.BlockSpec(shape, lambda i, _n=len(shape): (0,) * _n,
                            pipeline_mode=single_buf)

    def tiled_spec(shape, index_map):
        if nb == 1:
            return pl.BlockSpec(shape, index_map, pipeline_mode=single_buf)
        return pl.BlockSpec(shape, index_map)

    in_specs = [tiled_spec((BB, I), lambda i: (i, 0)), invariant_spec((I, Hp))]
    if L > 1:
        in_specs.append(invariant_spec((L - 1, Hp, Hp)))
    in_specs += [invariant_spec((L, Hp, Hp)), invariant_spec((L, 1, Hp))]
    out_specs = tiled_spec((S, BB, Hp), lambda i: (0, i, 0))

    scratch_shapes = []
    if L > 1:
        scratch_shapes.append(pltpu.VMEM((S, BB, Hp), jnp.float32))

    # VMEM budget from actual buffer sizes (buffer counts included), clamped to the
    # chip's physical VMEM. Replaces the previous hard-coded 32 MiB cap.
    def nbytes(shape, itemsize):
        n = 1
        for d in shape:
            n *= d
        return n * itemsize

    io_bufs = 1 if nb == 1 else 2
    needed = 0
    needed += nbytes((BB, I), 4) * io_bufs                 # x
    needed += nbytes((I, Hp), 2)                           # w_ih0 (bf16, 1 buffer)
    if L > 1:
        needed += nbytes((L - 1, Hp, Hp), 2)               # w_ih_rest
        needed += nbytes((S, BB, Hp), 4)                   # xw scratch
    needed += nbytes((L, Hp, Hp), 2)                       # w_hh
    needed += nbytes((L, 8, Hp), 4)                        # biases (sublane-padded)
    needed += nbytes((S, BB, Hp), 4) * io_bufs             # output
    needed = int(needed * 1.25) + (4 << 20)                # headroom for temporaries

    phys = _physical_vmem_bytes()
    vmem_limit = min(max(32 << 20, needed), int(phys * 0.9))

    kern = functools.partial(_rnn_kernel, seq_length=S, num_layers=L,
                             act_type=params["act_type"])

    o_sbh = pl.pallas_call(
        kern,
        out_shape=jax.ShapeDtypeStruct((S, Bp, Hp), f32),
        grid=(nb,),
        in_specs=in_specs,
        out_specs=out_specs,
        scratch_shapes=scratch_shapes,
        compiler_params=pltpu.CompilerParams(
            dimension_semantics=("parallel",) if nb > 1 else ("arbitrary",),
            vmem_limit_bytes=vmem_limit,
        ),
    )(*args)

    # Slice off padding, return batch-first (B, S, H) like PyTorch (batch_first=True).
    # (Kept time-major in-kernel so every per-step store is a lane-dense full tile.)
    return jnp.transpose(o_sbh[:, :B, :H], (1, 0, 2))


def init_weights(key, params):
    """Deterministic init matching PyTorch RNN shapes: U(-1/sqrt(H), 1/sqrt(H))."""
    I = params["input_size"]
    H = params["hidden_size"]
    L = params["num_rec_layers"]
    bias = params["bias"]
    k = 1.0 / jnp.sqrt(H)
    keys = jax.random.split(key, 4)
    # Stored pre-transposed so the kernel does (B, in) @ (in, H).
    w_ih0 = jax.random.uniform(keys[0], (I, H), jnp.float32, -k, k)
    w_ih_rest = jax.random.uniform(keys[1], (L - 1, H, H), jnp.float32, -k, k)
    w_hh = jax.random.uniform(keys[2], (L, H, H), jnp.float32, -k, k)
    if bias:
        bkeys = jax.random.split(keys[3], 2)
        b_ih = jax.random.uniform(bkeys[0], (L, 1, H), jnp.float32, -k, k)
        b_hh = jax.random.uniform(bkeys[1], (L, 1, H), jnp.float32, -k, k)
    else:
        b_ih = jnp.zeros((L, 1, H), jnp.float32)
        b_hh = jnp.zeros((L, 1, H), jnp.float32)
    return w_ih0, w_ih_rest, w_hh, b_ih, b_hh


def one_to_many_reference(x, params, weights):
    """Pure-JAX f32 reference of PyTorch OneToMany forward."""
    if x.ndim == 3:
        x = x[:, 0, :]
    B = x.shape[0]
    H = params["hidden_size"]
    S = params["seq_length"]
    L = params["num_rec_layers"]
    act = _act(params["act_type"])
    w_ih0, w_ih_rest, w_hh, b_ih, b_hh = weights

    layer_in = jnp.broadcast_to(x[:, None, :], (B, S, x.shape[-1]))  # repeated input
    for l in range(L):
        w_in = w_ih0 if l == 0 else w_ih_rest[l - 1]
        h = jnp.zeros((B, H), jnp.float32)
        outs = []
        for t in range(S):
            h = act(layer_in[:, t, :] @ w_in + b_ih[l] + h @ w_hh[l] + b_hh[l])
            outs.append(h)
        layer_in = jnp.stack(outs, axis=1)  # (B, S, H)
    return layer_in


if __name__ == "__main__":
    params = dict(
        input_size=16,
        hidden_size=32,
        seq_length=8,
        num_rec_layers=2,
        bias=True,
        act_type="tanh",
    )
    key = jax.random.PRNGKey(0)
    kx, kw = jax.random.split(key)
    B = 4
    x = jax.random.normal(kx, (B, params["input_size"]), jnp.float32)  # 2D OneToMany input
    weights = init_weights(kw, params)

    o = one_to_many_forward(x, params, weights)
    o = jax.block_until_ready(o)

    o_ref = one_to_many_reference(x, params, weights)
    assert o.shape == (B, params["seq_length"], params["hidden_size"])
    # bf16 matmul operands (f32 accumulate) -> relaxed tolerance vs. the f32 reference.
    assert jnp.allclose(o, o_ref, rtol=3e-2, atol=3e-2), "mismatch vs reference"

    print("KERNEL_OK")
</pallas_src>

<mosaic_0001>
module attributes {stable_mosaic.version = 11 : i64} {
  func.func @_rnn_kernel(%arg0: i32, %arg1: memref<8x16xf32, #tpu.memory_space<vmem>>, %arg2: memref<16x128xbf16, #tpu.memory_space<vmem>>, %arg3: memref<1x128x128xbf16, #tpu.memory_space<vmem>>, %arg4: memref<2x128x128xbf16, #tpu.memory_space<vmem>>, %arg5: memref<2x1x128xf32, #tpu.memory_space<vmem>>, %arg6: memref<8x8x128xf32, #tpu.memory_space<vmem>>, %arg7: memref<8x8x128xf32, #tpu.memory_space<vmem>>) attributes {dimension_semantics = [#tpu.dimension_semantics<arbitrary>], iteration_bounds = array<i64: 1>, scalar_prefetch = 0 : i64, scratch_operands = 1 : i64, tpu.core_type = #tpu.core_type<tc>, window_params = [{pipeline_mode = #tpu.pipeline_mode<synchronous>, transform_indices = @transform_0, window_bounds = array<i64: 8, 16>}, {pipeline_mode = #tpu.pipeline_mode<synchronous>, transform_indices = @transform_1, window_bounds = array<i64: 16, 128>}, {pipeline_mode = #tpu.pipeline_mode<synchronous>, transform_indices = @transform_2, window_bounds = array<i64: 1, 128, 128>}, {pipeline_mode = #tpu.pipeline_mode<synchronous>, transform_indices = @transform_3, window_bounds = array<i64: 2, 128, 128>}, {pipeline_mode = #tpu.pipeline_mode<synchronous>, transform_indices = @transform_4, window_bounds = array<i64: 2, 1, 128>}, {pipeline_mode = #tpu.pipeline_mode<synchronous>, transform_indices = @transform_5, window_bounds = array<i64: 8, 8, 128>}]} {
    %c0 = arith.constant 0 : index
    %c0_0 = arith.constant 0 : index
    %0 = vector.load %arg1[%c0, %c0_0] : memref<8x16xf32, #tpu.memory_space<vmem>>, vector<8x16xf32>
    %1 = arith.truncf %0 : vector<8x16xf32> to vector<8x16xbf16>
    %c0_1 = arith.constant 0 : index
    %c0_2 = arith.constant 0 : index
    %2 = vector.load %arg2[%c0_1, %c0_2] : memref<16x128xbf16, #tpu.memory_space<vmem>>, vector<16x128xbf16>
    %cst = arith.constant dense<0.000000e+00> : vector<8x128xf32>
    %3 = tpu.matmul %1, %2, %cst {dimension_numbers = #tpu.dot_dimension_numbers<[1], [0], [0], [1], [0, 0, 1, 1], [], []>} : vector<8x16xbf16>, vector<16x128xbf16>, vector<8x128xf32> -> vector<8x128xf32>
    %c0_3 = arith.constant 0 : index
    %c0_4 = arith.constant 0 : index
    %c0_5 = arith.constant 0 : index
    %4 = vector.load %arg5[%c0_3, %c0_4, %c0_5] : memref<2x1x128xf32, #tpu.memory_space<vmem>>, vector<1x1x128xf32>
    %5 = vector.shape_cast %4 : vector<1x1x128xf32> to vector<1x128xf32>
    %6 = vector.broadcast %5 : vector<1x128xf32> to vector<8x128xf32>
    %7 = arith.addf %3, %6 : vector<8x128xf32>
    %c0_6 = arith.constant 0 : index
    %c0_7 = arith.constant 0 : index
    %c0_8 = arith.constant 0 : index
    %8 = vector.load %arg4[%c0_6, %c0_7, %c0_8] : memref<2x128x128xbf16, #tpu.memory_space<vmem>>, vector<1x128x128xbf16>
    %9 = vector.shape_cast %8 : vector<1x128x128xbf16> to vector<128x128xbf16>
    %10 = math.tanh %7 : vector<8x128xf32>
    %c0_9 = arith.constant 0 : index
    %c0_10 = arith.constant 0 : index
    %c0_11 = arith.constant 0 : index
    %11 = vector.load %arg6[%c0_9, %c0_10, %c0_11] : memref<8x8x128xf32, #tpu.memory_space<vmem>>, vector<1x8x128xf32>
    %12 = vector.shape_cast %11 : vector<1x8x128xf32> to vector<8x128xf32>
    %13 = vector.shape_cast %10 : vector<8x128xf32> to vector<1x8x128xf32>
    tpu.vector_store %arg6[%c0_9, %c0_10, %c0_11], %13 {strides = array<i32>} : memref<8x8x128xf32, #tpu.memory_space<vmem>>, vector<1x8x128xf32>,
    %14 = arith.truncf %10 : vector<8x128xf32> to vector<8x128xbf16>
    %cst_12 = arith.constant dense<0.000000e+00> : vector<8x128xf32>
    %15 = tpu.matmul %14, %9, %cst_12 {dimension_numbers = #tpu.dot_dimension_numbers<[1], [0], [0], [1], [0, 0, 1, 1], [], []>} : vector<8x128xbf16>, vector<128x128xbf16>, vector<8x128xf32> -> vector<8x128xf32>
    %16 = arith.addf %7, %15 : vector<8x128xf32>
    %17 = math.tanh %16 : vector<8x128xf32>
    %c1 = arith.constant 1 : index
    %c0_13 = arith.constant 0 : index
    %c0_14 = arith.constant 0 : index
    %18 = vector.load %arg6[%c1, %c0_13, %c0_14] : memref<8x8x128xf32, #tpu.memory_space<vmem>>, vector<1x8x128xf32>
    %19 = vector.shape_cast %18 : vector<1x8x128xf32> to vector<8x128xf32>
    %20 = vector.shape_cast %17 : vector<8x128xf32> to vector<1x8x128xf32>
    tpu.vector_store %arg6[%c1, %c0_13, %c0_14], %20 {strides = array<i32>} : memref<8x8x128xf32, #tpu.memory_space<vmem>>, vector<1x8x128xf32>,
    %21 = arith.truncf %17 : vector<8x128xf32> to vector<8x128xbf16>
    %cst_15 = arith.constant dense<0.000000e+00> : vector<8x128xf32>
    %22 = tpu.matmul %21, %9, %cst_15 {dimension_numbers = #tpu.dot_dimension_numbers<[1], [0], [0], [1], [0, 0, 1, 1], [], []>} : vector<8x128xbf16>, vector<128x128xbf16>, vector<8x128xf32> -> vector<8x128xf32>
    %23 = arith.addf %7, %22 : vector<8x128xf32>
    %24 = math.tanh %23 : vector<8x128xf32>
    %c2 = arith.constant 2 : index
    %c0_16 = arith.constant 0 : index
    %c0_17 = arith.constant 0 : index
    %25 = vector.load %arg6[%c2, %c0_16, %c0_17] : memref<8x8x128xf32, #tpu.memory_space<vmem>>, vector<1x8x128xf32>
    %26 = vector.shape_cast %25 : vector<1x8x128xf32> to vector<8x128xf32>
    %27 = vector.shape_cast %24 : vector<8x128xf32> to vector<1x8x128xf32>
    tpu.vector_store %arg6[%c2, %c0_16, %c0_17], %27 {strides = array<i32>} : memref<8x8x128xf32, #tpu.memory_space<vmem>>, vector<1x8x128xf32>,
    %28 = arith.truncf %24 : vector<8x128xf32> to vector<8x128xbf16>
    %cst_18 = arith.constant dense<0.000000e+00> : vector<8x128xf32>
    %29 = tpu.matmul %28, %9, %cst_18 {dimension_numbers = #tpu.dot_dimension_numbers<[1], [0], [0], [1], [0, 0, 1, 1], [], []>} : vector<8x128xbf16>, vector<128x128xbf16>, vector<8x128xf32> -> vector<8x128xf32>
    %30 = arith.addf %7, %29 : vector<8x128xf32>
    %31 = math.tanh %30 : vector<8x128xf32>
    %c3 = arith.constant 3 : index
    %c0_19 = arith.constant 0 : index
    %c0_20 = arith.constant 0 : index
    %32 = vector.load %arg6[%c3, %c0_19, %c0_20] : memref<8x8x128xf32, #tpu.memory_space<vmem>>, vector<1x8x128xf32>
    %33 = vector.shape_cast %32 : vector<1x8x128xf32> to vector<8x128xf32>
    %34 = vector.shape_cast %31 : vector<8x128xf32> to vector<1x8x128xf32>
    tpu.vector_store %arg6[%c3, %c0_19, %c0_20], %34 {strides = array<i32>} : memref<8x8x128xf32, #tpu.memory_space<vmem>>, vector<1x8x128xf32>,
    %35 = arith.truncf %31 : vector<8x128xf32> to vector<8x128xbf16>
    %cst_21 = arith.constant dense<0.000000e+00> : vector<8x128xf32>
    %36 = tpu.matmul %35, %9, %cst_21 {dimension_numbers = #tpu.dot_dimension_numbers<[1], [0], [0], [1], [0, 0, 1, 1], [], []>} : vector<8x128xbf16>, vector<128x128xbf16>, vector<8x128xf32> -> vector<8x128xf32>
    %37 = arith.addf %7, %36 : vector<8x128xf32>
    %38 = math.tanh %37 : vector<8x128xf32>
    %c4 = arith.constant 4 : index
    %c0_22 = arith.constant 0 : index
    %c0_23 = arith.constant 0 : index
    %39 = vector.load %arg6[%c4, %c0_22, %c0_23] : memref<8x8x128xf32, #tpu.memory_space<vmem>>, vector<1x8x128xf32>
    %40 = vector.shape_cast %39 : vector<1x8x128xf32> to vector<8x128xf32>
    %41 = vector.shape_cast %38 : vector<8x128xf32> to vector<1x8x128xf32>
    tpu.vector_store %arg6[%c4, %c0_22, %c0_23], %41 {strides = array<i32>} : memref<8x8x128xf32, #tpu.memory_space<vmem>>, vector<1x8x128xf32>,
    %42 = arith.truncf %38 : vector<8x128xf32> to vector<8x128xbf16>
    %cst_24 = arith.constant dense<0.000000e+00> : vector<8x128xf32>
    %43 = tpu.matmul %42, %9, %cst_24 {dimension_numbers = #tpu.dot_dimension_numbers<[1], [0], [0], [1], [0, 0, 1, 1], [], []>} : vector<8x128xbf16>, vector<128x128xbf16>, vector<8x128xf32> -> vector<8x128xf32>
    %44 = arith.addf %7, %43 : vector<8x128xf32>
    %45 = math.tanh %44 : vector<8x128xf32>
    %c5 = arith.constant 5 : index
    %c0_25 = arith.constant 0 : index
    %c0_26 = arith.constant 0 : index
    %46 = vector.load %arg6[%c5, %c0_25, %c0_26] : memref<8x8x128xf32, #tpu.memory_space<vmem>>, vector<1x8x128xf32>
    %47 = vector.shape_cast %46 : vector<1x8x128xf32> to vector<8x128xf32>
    %48 = vector.shape_cast %45 : vector<8x128xf32> to vector<1x8x128xf32>
    tpu.vector_store %arg6[%c5, %c0_25, %c0_26], %48 {strides = array<i32>} : memref<8x8x128xf32, #tpu.memory_space<vmem>>, vector<1x8x128xf32>,
    %49 = arith.truncf %45 : vector<8x128xf32> to vector<8x128xbf16>
    %cst_27 = arith.constant dense<0.000000e+00> : vector<8x128xf32>
    %50 = tpu.matmul %49, %9, %cst_27 {dimension_numbers = #tpu.dot_dimension_numbers<[1], [0], [0], [1], [0, 0, 1, 1], [], []>} : vector<8x128xbf16>, vector<128x128xbf16>, vector<8x128xf32> -> vector<8x128xf32>
    %51 = arith.addf %7, %50 : vector<8x128xf32>
    %52 = math.tanh %51 : vector<8x128xf32>
    %c6 = arith.constant 6 : index
    %c0_28 = arith.constant 0 : index
    %c0_29 = arith.constant 0 : index
    %53 = vector.load %arg6[%c6, %c0_28, %c0_29] : memref<8x8x128xf32, #tpu.memory_space<vmem>>, vector<1x8x128xf32>
    %54 = vector.shape_cast %53 : vector<1x8x128xf32> to vector<8x128xf32>
    %55 = vector.shape_cast %52 : vector<8x128xf32> to vector<1x8x128xf32>
    tpu.vector_store %arg6[%c6, %c0_28, %c0_29], %55 {strides = array<i32>} : memref<8x8x128xf32, #tpu.memory_space<vmem>>, vector<1x8x128xf32>,
    %56 = arith.truncf %52 : vector<8x128xf32> to vector<8x128xbf16>
    %cst_30 = arith.constant dense<0.000000e+00> : vector<8x128xf32>
    %57 = tpu.matmul %56, %9, %cst_30 {dimension_numbers = #tpu.dot_dimension_numbers<[1], [0], [0], [1], [0, 0, 1, 1], [], []>} : vector<8x128xbf16>, vector<128x128xbf16>, vector<8x128xf32> -> vector<8x128xf32>
    %58 = arith.addf %7, %57 : vector<8x128xf32>
    %59 = math.tanh %58 : vector<8x128xf32>
    %c7 = arith.constant 7 : index
    %c0_31 = arith.constant 0 : index
    %c0_32 = arith.constant 0 : index
    %60 = vector.load %arg6[%c7, %c0_31, %c0_32] : memref<8x8x128xf32, #tpu.memory_space<vmem>>, vector<1x8x128xf32>
    %61 = vector.shape_cast %60 : vector<1x8x128xf32> to vector<8x128xf32>
    %62 = vector.shape_cast %59 : vector<8x128xf32> to vector<1x8x128xf32>
    tpu.vector_store %arg6[%c7, %c0_31, %c0_32], %62 {strides = array<i32>} : memref<8x8x128xf32, #tpu.memory_space<vmem>>, vector<1x8x128xf32>,
    %c0_33 = arith.constant 0 : index
    %c0_34 = arith.constant 0 : index
    %c0_35 = arith.constant 0 : index
    %63 = vector.load %arg3[%c0_33, %c0_34, %c0_35] : memref<1x128x128xbf16, #tpu.memory_space<vmem>>, vector<1x128x128xbf16>
    %64 = vector.shape_cast %63 : vector<1x128x128xbf16> to vector<128x128xbf16>
    %c1_36 = arith.constant 1 : index
    %c0_37 = arith.constant 0 : index
    %c0_38 = arith.constant 0 : index
    %65 = vector.load %arg5[%c1_36, %c0_37, %c0_38] : memref<2x1x128xf32, #tpu.memory_space<vmem>>, vector<1x1x128xf32>
    %66 = vector.shape_cast %65 : vector<1x1x128xf32> to vector<1x128xf32>
    %c0_39 = arith.constant 0 : index
    %c0_40 = arith.constant 0 : index
    %c0_41 = arith.constant 0 : index
    %67 = vector.load %arg6[%c0_39, %c0_40, %c0_41] : memref<8x8x128xf32, #tpu.memory_space<vmem>>, vector<8x8x128xf32>
    %68 = vector.shape_cast %67 : vector<8x8x128xf32> to vector<64x128xf32>
    %69 = arith.truncf %68 : vector<64x128xf32> to vector<64x128xbf16>
    %cst_42 = arith.constant dense<0.000000e+00> : vector<64x128xf32>
    %70 = tpu.matmul %69, %64, %cst_42 {dimension_numbers = #tpu.dot_dimension_numbers<[1], [0], [0], [1], [0, 0, 1, 1], [], []>} : vector<64x128xbf16>, vector<128x128xbf16>, vector<64x128xf32> -> vector<64x128xf32>
    %71 = vector.broadcast %66 : vector<1x128xf32> to vector<64x128xf32>
    %72 = arith.addf %70, %71 : vector<64x128xf32>
    %73 = vector.shape_cast %72 : vector<64x128xf32> to vector<8x8x128xf32>
    %c0_43 = arith.constant 0 : index
    %c0_44 = arith.constant 0 : index
    %c0_45 = arith.constant 0 : index
    %74 = vector.load %arg7[%c0_43, %c0_44, %c0_45] : memref<8x8x128xf32, #tpu.memory_space<vmem>>, vector<8x8x128xf32>
    tpu.vector_store %arg7[%c0_43, %c0_44, %c0_45], %73 {strides = array<i32>} : memref<8x8x128xf32, #tpu.memory_space<vmem>>, vector<8x8x128xf32>,
    %c1_46 = arith.constant 1 : index
    %c0_47 = arith.constant 0 : index
    %c0_48 = arith.constant 0 : index
    %75 = vector.load %arg4[%c1_46, %c0_47, %c0_48] : memref<2x128x128xbf16, #tpu.memory_space<vmem>>, vector<1x128x128xbf16>
    %76 = vector.shape_cast %75 : vector<1x128x128xbf16> to vector<128x128xbf16>
    %c0_49 = arith.constant 0 : index
    %c0_50 = arith.constant 0 : index
    %c0_51 = arith.constant 0 : index
    %77 = vector.load %arg7[%c0_49, %c0_50, %c0_51] : memref<8x8x128xf32, #tpu.memory_space<vmem>>, vector<1x8x128xf32>
    %78 = vector.shape_cast %77 : vector<1x8x128xf32> to vector<8x128xf32>
    %79 = math.tanh %78 : vector<8x128xf32>
    %c0_52 = arith.constant 0 : index
    %c0_53 = arith.constant 0 : index
    %c0_54 = arith.constant 0 : index
    %80 = vector.load %arg6[%c0_52, %c0_53, %c0_54] : memref<8x8x128xf32, #tpu.memory_space<vmem>>, vector<1x8x128xf32>
    %81 = vector.shape_cast %80 : vector<1x8x128xf32> to vector<8x128xf32>
    %82 = vector.shape_cast %79 : vector<8x128xf32> to vector<1x8x128xf32>
    tpu.vector_store %arg6[%c0_52, %c0_53, %c0_54], %82 {strides = array<i32>} : memref<8x8x128xf32, #tpu.memory_space<vmem>>, vector<1x8x128xf32>,
    %c1_55 = arith.constant 1 : index
    %c0_56 = arith.constant 0 : index
    %c0_57 = arith.constant 0 : index
    %83 = vector.load %arg7[%c1_55, %c0_56, %c0_57] : memref<8x8x128xf32, #tpu.memory_space<vmem>>, vector<1x8x128xf32>
    %84 = vector.shape_cast %83 : vector<1x8x128xf32> to vector<8x128xf32>
    %85 = arith.truncf %79 : vector<8x128xf32> to vector<8x128xbf16>
    %cst_58 = arith.constant dense<0.000000e+00> : vector<8x128xf32>
    %86 = tpu.matmul %85, %76, %cst_58 {dimension_numbers = #tpu.dot_dimension_numbers<[1], [0], [0], [1], [0, 0, 1, 1], [], []>} : vector<8x128xbf16>, vector<128x128xbf16>, vector<8x128xf32> -> vector<8x128xf32>
    %87 = arith.addf %84, %86 : vector<8x128xf32>
    %88 = math.tanh %87 : vector<8x128xf32>
    %c1_59 = arith.constant 1 : index
    %c0_60 = arith.constant 0 : index
    %c0_61 = arith.constant 0 : index
    %89 = vector.load %arg6[%c1_59, %c0_60, %c0_61] : memref<8x8x128xf32, #tpu.memory_space<vmem>>, vector<1x8x128xf32>
    %90 = vector.shape_cast %89 : vector<1x8x128xf32> to vector<8x128xf32>
    %91 = vector.shape_cast %88 : vector<8x128xf32> to vector<1x8x128xf32>
    tpu.vector_store %arg6[%c1_59, %c0_60, %c0_61], %91 {strides = array<i32>} : memref<8x8x128xf32, #tpu.memory_space<vmem>>, vector<1x8x128xf32>,
    %c2_62 = arith.constant 2 : index
    %c0_63 = arith.constant 0 : index
    %c0_64 = arith.constant 0 : index
    %92 = vector.load %arg7[%c2_62, %c0_63, %c0_64] : memref<8x8x128xf32, #tpu.memory_space<vmem>>, vector<1x8x128xf32>
    %93 = vector.shape_cast %92 : vector<1x8x128xf32> to vector<8x128xf32>
    %94 = arith.truncf %88 : vector<8x128xf32> to vector<8x128xbf16>
    %cst_65 = arith.constant dense<0.000000e+00> : vector<8x128xf32>
    %95 = tpu.matmul %94, %76, %cst_65 {dimension_numbers = #tpu.dot_dimension_numbers<[1], [0], [0], [1], [0, 0, 1, 1], [], []>} : vector<8x128xbf16>, vector<128x128xbf16>, vector<8x128xf32> -> vector<8x128xf32>
    %96 = arith.addf %93, %95 : vector<8x128xf32>
    %97 = math.tanh %96 : vector<8x128xf32>
    %c2_66 = arith.constant 2 : index
    %c0_67 = arith.constant 0 : index
    %c0_68 = arith.constant 0 : index
    %98 = vector.load %arg6[%c2_66, %c0_67, %c0_68] : memref<8x8x128xf32, #tpu.memory_space<vmem>>, vector<1x8x128xf32>
    %99 = vector.shape_cast %98 : vector<1x8x128xf32> to vector<8x128xf32>
    %100 = vector.shape_cast %97 : vector<8x128xf32> to vector<1x8x128xf32>
    tpu.vector_store %arg6[%c2_66, %c0_67, %c0_68], %100 {strides = array<i32>} : memref<8x8x128xf32, #tpu.memory_space<vmem>>, vector<1x8x128xf32>,
    %c3_69 = arith.constant 3 : index
    %c0_70 = arith.constant 0 : index
    %c0_71 = arith.constant 0 : index
    %101 = vector.load %arg7[%c3_69, %c0_70, %c0_71] : memref<8x8x128xf32, #tpu.memory_space<vmem>>, vector<1x8x128xf32>
    %102 = vector.shape_cast %101 : vector<1x8x128xf32> to vector<8x128xf32>
    %103 = arith.truncf %97 : vector<8x128xf32> to vector<8x128xbf16>
    %cst_72 = arith.constant dense<0.000000e+00> : vector<8x128xf32>
    %104 = tpu.matmul %103, %76, %cst_72 {dimension_numbers = #tpu.dot_dimension_numbers<[1], [0], [0], [1], [0, 0, 1, 1], [], []>} : vector<8x128xbf16>, vector<128x128xbf16>, vector<8x128xf32> -> vector<8x128xf32>
    %105 = arith.addf %102, %104 : vector<8x128xf32>
    %106 = math.tanh %105 : vector<8x128xf32>
    %c3_73 = arith.constant 3 : index
    %c0_74 = arith.constant 0 : index
    %c0_75 = arith.constant 0 : index
    %107 = vector.load %arg6[%c3_73, %c0_74, %c0_75] : memref<8x8x128xf32, #tpu.memory_space<vmem>>, vector<1x8x128xf32>
    %108 = vector.shape_cast %107 : vector<1x8x128xf32> to vector<8x128xf32>
    %109 = vector.shape_cast %106 : vector<8x128xf32> to vector<1x8x128xf32>
    tpu.vector_store %arg6[%c3_73, %c0_74, %c0_75], %109 {strides = array<i32>} : memref<8x8x128xf32, #tpu.memory_space<vmem>>, vector<1x8x128xf32>,
    %c4_76 = arith.constant 4 : index
    %c0_77 = arith.constant 0 : index
    %c0_78 = arith.constant 0 : index
    %110 = vector.load %arg7[%c4_76, %c0_77, %c0_78] : memref<8x8x128xf32, #tpu.memory_space<vmem>>, vector<1x8x128xf32>
    %111 = vector.shape_cast %110 : vector<1x8x128xf32> to vector<8x128xf32>
    %112 = arith.truncf %106 : vector<8x128xf32> to vector<8x128xbf16>
    %cst_79 = arith.constant dense<0.000000e+00> : vector<8x128xf32>
    %113 = tpu.matmul %112, %76, %cst_79 {dimension_numbers = #tpu.dot_dimension_numbers<[1], [0], [0], [1], [0, 0, 1, 1], [], []>} : vector<8x128xbf16>, vector<128x128xbf16>, vector<8x128xf32> -> vector<8x128xf32>
    %114 = arith.addf %111, %113 : vector<8x128xf32>
    %115 = math.tanh %114 : vector<8x128xf32>
    %c4_80 = arith.constant 4 : index
    %c0_81 = arith.constant 0 : index
    %c0_82 = arith.constant 0 : index
    %116 = vector.load %arg6[%c4_80, %c0_81, %c0_82] : memref<8x8x128xf32, #tpu.memory_space<vmem>>, vector<1x8x128xf32>
    %117 = vector.shape_cast %116 : vector<1x8x128xf32> to vector<8x128xf32>
    %118 = vector.shape_cast %115 : vector<8x128xf32> to vector<1x8x128xf32>
    tpu.vector_store %arg6[%c4_80, %c0_81, %c0_82], %118 {strides = array<i32>} : memref<8x8x128xf32, #tpu.memory_space<vmem>>, vector<1x8x128xf32>,
    %c5_83 = arith.constant 5 : index
    %c0_84 = arith.constant 0 : index
    %c0_85 = arith.constant 0 : index
    %119 = vector.load %arg7[%c5_83, %c0_84, %c0_85] : memref<8x8x128xf32, #tpu.memory_space<vmem>>, vector<1x8x128xf32>
    %120 = vector.shape_cast %119 : vector<1x8x128xf32> to vector<8x128xf32>
    %121 = arith.truncf %115 : vector<8x128xf32> to vector<8x128xbf16>
    %cst_86 = arith.constant dense<0.000000e+00> : vector<8x128xf32>
    %122 = tpu.matmul %121, %76, %cst_86 {dimension_numbers = #tpu.dot_dimension_numbers<[1], [0], [0], [1], [0, 0, 1, 1], [], []>} : vector<8x128xbf16>, vector<128x128xbf16>, vector<8x128xf32> -> vector<8x128xf32>
    %123 = arith.addf %120, %122 : vector<8x128xf32>
    %124 = math.tanh %123 : vector<8x128xf32>
    %c5_87 = arith.constant 5 : index
    %c0_88 = arith.constant 0 : index
    %c0_89 = arith.constant 0 : index
    %125 = vector.load %arg6[%c5_87, %c0_88, %c0_89] : memref<8x8x128xf32, #tpu.memory_space<vmem>>, vector<1x8x128xf32>
    %126 = vector.shape_cast %125 : vector<1x8x128xf32> to vector<8x128xf32>
    %127 = vector.shape_cast %124 : vector<8x128xf32> to vector<1x8x128xf32>
    tpu.vector_store %arg6[%c5_87, %c0_88, %c0_89], %127 {strides = array<i32>} : memref<8x8x128xf32, #tpu.memory_space<vmem>>, vector<1x8x128xf32>,
    %c6_90 = arith.constant 6 : index
    %c0_91 = arith.constant 0 : index
    %c0_92 = arith.constant 0 : index
    %128 = vector.load %arg7[%c6_90, %c0_91, %c0_92] : memref<8x8x128xf32, #tpu.memory_space<vmem>>, vector<1x8x128xf32>
    %129 = vector.shape_cast %128 : vector<1x8x128xf32> to vector<8x128xf32>
    %130 = arith.truncf %124 : vector<8x128xf32> to vector<8x128xbf16>
    %cst_93 = arith.constant dense<0.000000e+00> : vector<8x128xf32>
    %131 = tpu.matmul %130, %76, %cst_93 {dimension_numbers = #tpu.dot_dimension_numbers<[1], [0], [0], [1], [0, 0, 1, 1], [], []>} : vector<8x128xbf16>, vector<128x128xbf16>, vector<8x128xf32> -> vector<8x128xf32>
    %132 = arith.addf %129, %131 : vector<8x128xf32>
    %133 = math.tanh %132 : vector<8x128xf32>
    %c6_94 = arith.constant 6 : index
    %c0_95 = arith.constant 0 : index
    %c0_96 = arith.constant 0 : index
    %134 = vector.load %arg6[%c6_94, %c0_95, %c0_96] : memref<8x8x128xf32, #tpu.memory_space<vmem>>, vector<1x8x128xf32>
    %135 = vector.shape_cast %134 : vector<1x8x128xf32> to vector<8x128xf32>
    %136 = vector.shape_cast %133 : vector<8x128xf32> to vector<1x8x128xf32>
    tpu.vector_store %arg6[%c6_94, %c0_95, %c0_96], %136 {strides = array<i32>} : memref<8x8x128xf32, #tpu.memory_space<vmem>>, vector<1x8x128xf32>,
    %c7_97 = arith.constant 7 : index
    %c0_98 = arith.constant 0 : index
    %c0_99 = arith.constant 0 : index
    %137 = vector.load %arg7[%c7_97, %c0_98, %c0_99] : memref<8x8x128xf32, #tpu.memory_space<vmem>>, vector<1x8x128xf32>
    %138 = vector.shape_cast %137 : vector<1x8x128xf32> to vector<8x128xf32>
    %139 = arith.truncf %133 : vector<8x128xf32> to vector<8x128xbf16>
    %cst_100 = arith.constant dense<0.000000e+00> : vector<8x128xf32>
    %140 = tpu.matmul %139, %76, %cst_100 {dimension_numbers = #tpu.dot_dimension_numbers<[1], [0], [0], [1], [0, 0, 1, 1], [], []>} : vector<8x128xbf16>, vector<128x128xbf16>, vector<8x128xf32> -> vector<8x128xf32>
    %141 = arith.addf %138, %140 : vector<8x128xf32>
    %142 = math.tanh %141 : vector<8x128xf32>
    %c7_101 = arith.constant 7 : index
    %c0_102 = arith.constant 0 : index
    %c0_103 = arith.constant 0 : index
    %143 = vector.load %arg6[%c7_101, %c0_102, %c0_103] : memref<8x8x128xf32, #tpu.memory_space<vmem>>, vector<1x8x128xf32>
    %144 = vector.shape_cast %143 : vector<1x8x128xf32> to vector<8x128xf32>
    %145 = vector.shape_cast %142 : vector<8x128xf32> to vector<1x8x128xf32>
    tpu.vector_store %arg6[%c7_101, %c0_102, %c0_103], %145 {strides = array<i32>} : memref<8x8x128xf32, #tpu.memory_space<vmem>>, vector<1x8x128xf32>,
    return
  }
  func.func @transform_0(%arg0: i32) -> (i32, i32) {
    %c0_i32 = arith.constant 0 : i32
    %c0_i32_0 = arith.constant 0 : i32
    return %arg0, %c0_i32 : i32, i32
  }
  func.func @transform_1(%arg0: i32) -> (i32, i32) {
    %c0_i32 = arith.constant 0 : i32
    %c0_i32_0 = arith.constant 0 : i32
    %c0_i32_1 = arith.constant 0 : i32
    return %c0_i32, %c0_i32_0 : i32, i32
  }
  func.func @transform_2(%arg0: i32) -> (i32, i32, i32) {
    %c0_i32 = arith.constant 0 : i32
    %c0_i32_0 = arith.constant 0 : i32
    %c0_i32_1 = arith.constant 0 : i32
    %c0_i32_2 = arith.constant 0 : i32
    return %c0_i32, %c0_i32_0, %c0_i32_1 : i32, i32, i32
  }
  func.func @transform_3(%arg0: i32) -> (i32, i32, i32) {
    %c0_i32 = arith.constant 0 : i32
    %c0_i32_0 = arith.constant 0 : i32
    %c0_i32_1 = arith.constant 0 : i32
    %c0_i32_2 = arith.constant 0 : i32
    return %c0_i32, %c0_i32_0, %c0_i32_1 : i32, i32, i32
  }
  func.func @transform_4(%arg0: i32) -> (i32, i32, i32) {
    %c0_i32 = arith.constant 0 : i32
    %c0_i32_0 = arith.constant 0 : i32
    %c0_i32_1 = arith.constant 0 : i32
    %c0_i32_2 = arith.constant 0 : i32
    return %c0_i32, %c0_i32_0, %c0_i32_1 : i32, i32, i32
  }
  func.func @transform_5(%arg0: i32) -> (i32, i32, i32) {
    %c0_i32 = arith.constant 0 : i32
    %c0_i32_0 = arith.constant 0 : i32
    %c0_i32_1 = arith.constant 0 : i32
    return %c0_i32, %arg0, %c0_i32_0 : i32, i32, i32
  }
}

</mosaic_0001>

<llo_original>
// kernel: tpu_custom_call.1
$region0: #{tpu_custom_call.1}
  #allocation0 [shape = 'u32[]', space=smem, size = 0x4, offset = 0x4, fixed_abs, tag = 'smem constant byte address 0x4 - core index']
  #allocation1 [shape = 'u32[144,128]{1,0:T(1,128)}', space=vmem, size = 0x12000, scoped, tag = 'internal scratch']
  #allocation2 [shape = 'f32[8,8,128]{2,1,0:T(8,128)}', space=vmem, size = 0x8000, scoped, tag = 'scratch operand']
  %s0 = inlined_call_operand.hbm [shape: f32[8,16], index: 0, kind: input, shape index: {}]
  %s1 = inlined_call_operand.hbm [shape: bf16[16,128], index: 1, kind: input, shape index: {}]
  %s2 = inlined_call_operand.hbm [shape: bf16[1,128,128], index: 2, kind: input, shape index: {}]
  %s3 = inlined_call_operand.hbm [shape: bf16[2,128,128], index: 3, kind: input, shape index: {}]
  %s4 = inlined_call_operand.vmem [shape: f32[2,1,128], index: 4, kind: input, shape index: {}]
  %s5 = inlined_call_operand.hbm [shape: f32[8,8,128], index: 5, kind: output, shape index: {}]
  %s6 = sld [smem:[#allocation0]]
  $region46: #{tpu_custom_call.1} parent=0
    _
  %s8 = ssub.s32 1, %s6
  %s9 = scalar_select 0, %s8, %s6
  $region1: #{tpu_custom_call.1} parent=0
    #allocation3 [shape = 'u8[4096]{0}', space=vmem, size = 0x1000, scoped, tag = 'input window, operand 0, single buffered']
    #allocation4 [shape = 's32[1]{0}', space=sflag, size = 0x4, scoped, tag = 'scoped memory for tpu_custom_call.1']
    #allocation5 [shape = 's32[1]{0}', space=sflag, size = 0x4, scoped, tag = 'scoped memory for tpu_custom_call.1']
    #allocation6 [shape = 'u8[4096]{0}', space=vmem, size = 0x1000, scoped, tag = 'input window, operand 1, single buffered']
    #allocation7 [shape = 's32[1]{0}', space=sflag, size = 0x4, scoped, tag = 'scoped memory for tpu_custom_call.1']
    #allocation8 [shape = 'u8[32768]{0}', space=vmem, size = 0x8000, scoped, tag = 'input window, operand 2, single buffered']
    #allocation9 [shape = 'u8[65536]{0}', space=vmem, size = 0x10000, scoped, tag = 'input window, operand 3, single buffered']
    #allocation10 [shape = 's32[1]{0}', space=sflag, size = 0x4, scoped, tag = 'scoped memory for tpu_custom_call.1']
    #allocation11 [shape = 'u8[32768]{0}', space=vmem, size = 0x8000, scoped, tag = 'output window, operand 0, single buffered']
    %10 = vsyncpa [#allocation4], 0
    %11 = vsyncpa [#allocation7], 0
    %12 = vsyncpa [#allocation10], 0
    %13 = vsyncpa [#allocation5], 0
    // Predicated region
    $region2: #{tpu_custom_call.1} parent=1 // pred_check
      _
    $region3: #{tpu_custom_call.1} parent=1 // pred_check_branch
      %15 = sbr.rel (0) target = $region5
    $region4: #{tpu_custom_call.1} parent=1 // pred_region
      %s17 = ssub.s32 128, 128
      %18 = vsyncadd [#allocation4], %s17
      %s20 = sshll.u32 [#allocation3], 4
      %s21 = int_to_ptr.vmem [resolvable:$true] %s20
      %23 = dma.hbm_to_vmem [thread:$0]  %s0, 128, %s21, [#allocation4]
    $region5: #{tpu_custom_call.1} parent=1 // pred_fallthru
      _
    // Predicated region
    $region6: #{tpu_custom_call.1} parent=1 // pred_check
      _
    $region7: #{tpu_custom_call.1} parent=1 // pred_check_branch
      %25 = sbr.rel (0) target = $region9
    $region8: #{tpu_custom_call.1} parent=1 // pred_region
      %s27 = ssub.s32 128, 128
      %28 = vsyncadd [#allocation7], %s27
      %s29 = sshll.u32 [#allocation6], 4
      %s30 = int_to_ptr.vmem [resolvable:$true] %s29
      %35 = dma.hbm_to_vmem [thread:$0]  %s1, 128, %s30, [#allocation7], 64, 64, 4
    $region9: #{tpu_custom_call.1} parent=1 // pred_fallthru
      _
    // Predicated region
    $region10: #{tpu_custom_call.1} parent=1 // pred_check
      _
    $region11: #{tpu_custom_call.1} parent=1 // pred_check_branch
      %37 = sbr.rel (0) target = $region13
    $region12: #{tpu_custom_call.1} parent=1 // pred_region
      %s39 = ssub.s32 1024, 1024
      %40 = vsyncadd [#allocation7], %s39
      %s41 = sshll.u32 [#allocation8], 4
      %s42 = int_to_ptr.vmem [resolvable:$true] %s41
      %47 = dma.hbm_to_vmem [thread:$0]  %s2, 1024, %s42, [#allocation7], 64, 64, 4
    $region13: #{tpu_custom_call.1} parent=1 // pred_fallthru
      _
    // Predicated region
    $region14: #{tpu_custom_call.1} parent=1 // pred_check
      _
    $region15: #{tpu_custom_call.1} parent=1 // pred_check_branch
      %49 = sbr.rel (0) target = $region17
    $region16: #{tpu_custom_call.1} parent=1 // pred_region
      %s51 = ssub.s32 2048, 2048
      %52 = vsyncadd [#allocation10], %s51
      %s53 = sshll.u32 [#allocation9], 4
      %s54 = int_to_ptr.vmem [resolvable:$true] %s53
      %59 = dma.hbm_to_vmem [thread:$0]  %s3, 2048, %s54, [#allocation10], 64, 64, 4
    $region17: #{tpu_custom_call.1} parent=1 // pred_fallthru
      _
    // Predicated region
    $region18: #{tpu_custom_call.1} parent=1 // pred_check
      _
    $region19: #{tpu_custom_call.1} parent=1 // pred_check_branch
      %61 = sbr.rel (0) target = $region21
    $region20: #{tpu_custom_call.1} parent=1 // pred_region
      _
    $region21: #{tpu_custom_call.1} parent=1 // pred_fallthru
      _
    // Predicated region
    $region22: #{tpu_custom_call.1} parent=1 // pred_check
      _
    $region23: #{tpu_custom_call.1} parent=1 // pred_check_branch
      %63 = sbr.rel (0) target = $region25
    $region24: #{tpu_custom_call.1} parent=1 // pred_region
      %64 = dma.done [#allocation4], 128
    $region25: #{tpu_custom_call.1} parent=1 // pred_fallthru
      _
    // Predicated region
    $region26: #{tpu_custom_call.1} parent=1 // pred_check
      _
    $region27: #{tpu_custom_call.1} parent=1 // pred_check_branch
      %66 = sbr.rel (0) target = $region29
    $region28: #{tpu_custom_call.1} parent=1 // pred_region
      %67 = dma.done [#allocation7], 128
    $region29: #{tpu_custom_call.1} parent=1 // pred_fallthru
      _
    // Predicated region
    $region30: #{tpu_custom_call.1} parent=1 // pred_check
      _
    $region31: #{tpu_custom_call.1} parent=1 // pred_check_branch
      %69 = sbr.rel (0) target = $region33
    $region32: #{tpu_custom_call.1} parent=1 // pred_region
      %70 = dma.done [#allocation7], 1024
    $region33: #{tpu_custom_call.1} parent=1 // pred_fallthru
      _
    // Predicated region
    $region34: #{tpu_custom_call.1} parent=1 // pred_check
      _
    $region35: #{tpu_custom_call.1} parent=1 // pred_check_branch
      %72 = sbr.rel (0) target = $region37
    $region36: #{tpu_custom_call.1} parent=1 // pred_region
      %73 = dma.done [#allocation10], 2048
    $region37: #{tpu_custom_call.1} parent=1 // pred_fallthru
      _
    %v75 = vld [vmem:[#allocation3] sm:$0xff]
    %v76 = vpack.c.bf16 %v75, %v75
    %v77 = vld [vmem:[#allocation6] sm:$0xf]
    %v78 = vld [vmem:[#allocation6 + $0x4] sm:$0xf]
    %v79 = vld [vmem:[%s4] sm:$0x1]
    %v81 = vlaneseq
    %v82 = vshrl.u32 %v81, 7
    %v83 = vsub.s32 0, %v82
    %v84 = vrot.slane %v79, %v83
    %v88 = vunpack.c.l.b16 %v77
    %v89 = vunpack.c.l.b16 %v78
    %v90 = vpack.c.b16 %v89, %v88
    %vm92 = vcmask 130048
    %v94 = vsel %vm92, %v76, 0
    %96 = vmatprep.subr.bf16.mxu0 0
    %97 = vmatpush1.bf16.msra.mxu0 %v90
    %98 = vmatprep.subr.bf16.mxu0 0
    %99 = vmatpush1.bf16.msra.mxu0 0
    %100 = vmatprep.subr.bf16.mxu0 0
    %101 = vmatpush1.bf16.msra.mxu0 0
    %102 = vmatprep.subr.bf16.mxu0 0
    %103 = vmatpush1.bf16.msra.mxu0 0
    %104 = vmatprep.subr.bf16.mxu0 0
    %105 = vmatpush1.bf16.msra.mxu0 0
    %106 = vmatprep.subr.bf16.mxu0 0
    %107 = vmatpush1.bf16.msra.mxu0 0
    %108 = vmatprep.subr.bf16.mxu0 0
    %109 = vmatpush1.bf16.msra.mxu0 0
    %110 = vmatprep.subr.bf16.mxu0 0
    %111 = vmatpush1.bf16.msra.mxu0 0
    %112 = vmatprep.subr.bf16.mxu0 0
    %113 = vmatpush1.bf16.msra.mxu0 0
    %114 = vmatprep.subr.bf16.mxu0 0
    %115 = vmatpush1.bf16.msra.mxu0 0
    %116 = vmatprep.subr.bf16.mxu0 0
    %117 = vmatpush1.bf16.msra.mxu0 0
    %118 = vmatprep.subr.bf16.mxu0 0
    %119 = vmatpush1.bf16.msra.mxu0 0
    %120 = vmatprep.subr.bf16.mxu0 0
    %121 = vmatpush1.bf16.msra.mxu0 0
    %122 = vmatprep.subr.bf16.mxu0 0
    %123 = vmatpush1.bf16.msra.mxu0 0
    %124 = vmatprep.subr.bf16.mxu0 0
    %125 = vmatpush1.bf16.msra.mxu0 0
    %126 = vmatprep.subr.bf16.mxu0 0
    %127 = vmatpush1.bf16.msra.mxu0 0
    %128 = vmatprep.mubr.bf16.mxu0 0
    %129 = vmatmul.mubr.bf16.gmra.mrb[0].mxu0 %v94
    %v130 = vpop.f32.mrb[0].mxu0
    %v131 = vadd.f32 %v84, %v130
    %v132 = vpop.f32.mrb[0].mxu0
    %v133 = vpop.f32.mrb[0].mxu0
    %v134 = vpop.f32.mrb[0].mxu0
    %135 = vdwg.mxu0
    %v136 = vld [vmem:[#allocation9] sm:$0xf]
    %v137 = vld [vmem:[#allocation9 + $0x4] sm:$0xf]
    %v138 = vld [vmem:[#allocation9 + $0x8] sm:$0xf]
    %v139 = vld [vmem:[#allocation9 + $0xc] sm:$0xf]
    %v140 = vld [vmem:[#allocation9 + $0x10] sm:$0xf]
    %v141 = vld [vmem:[#allocation9 + $0x14] sm:$0xf]
    %v142 = vld [vmem:[#allocation9 + $0x18] sm:$0xf]
    %v143 = vld [vmem:[#allocation9 + $0x1c] sm:$0xf]
    %v144 = vld [vmem:[#allocation9 + $0x20] sm:$0xf]
    %v145 = vld [vmem:[#allocation9 + $0x24] sm:$0xf]
    %v146 = vld [vmem:[#allocation9 + $0x28] sm:$0xf]
    %v147 = vld [vmem:[#allocation9 + $0x2c] sm:$0xf]
    %v148 = vld [vmem:[#allocation9 + $0x30] sm:$0xf]
    %v149 = vld [vmem:[#allocation9 + $0x34] sm:$0xf]
    %v150 = vld [vmem:[#allocation9 + $0x38] sm:$0xf]
    %v151 = vld [vmem:[#allocation9 + $0x3c] sm:$0xf]
    %v152 = vtanh.pop %v131
    %153 = vst [vmem:[#allocation11] sm:$0xff] %v152
    %v154 = vpack.c.bf16 %v152, %v152
    %v171 = vunpack.c.l.b16 %v136
    %v172 = vunpack.c.l.b16 %v137
    %v173 = vunpack.c.l.b16 %v138
    %v174 = vunpack.c.l.b16 %v139
    %v175 = vunpack.c.l.b16 %v140
    %v176 = vunpack.c.l.b16 %v141
    %v177 = vunpack.c.l.b16 %v142
    %v178 = vunpack.c.l.b16 %v143
    %v179 = vunpack.c.l.b16 %v144
    %v180 = vunpack.c.l.b16 %v145
    %v181 = vunpack.c.l.b16 %v146
    %v182 = vunpack.c.l.b16 %v147
    %v183 = vunpack.c.l.b16 %v148
    %v184 = vunpack.c.l.b16 %v149
    %v185 = vunpack.c.l.b16 %v150
    %v186 = vunpack.c.l.b16 %v151
    %v187 = vpack.c.b16 %v172, %v171
    %v188 = vpack.c.b16 %v174, %v173
    %v189 = vpack.c.b16 %v176, %v175
    %v190 = vpack.c.b16 %v178, %v177
    %v191 = vpack.c.b16 %v180, %v179
    %v192 = vpack.c.b16 %v182, %v181
    %v193 = vpack.c.b16 %v184, %v183
    %v194 = vpack.c.b16 %v186, %v185
    %203 = vmatprep.subr.bf16.mxu0 0
    %204 = vmatpush1.bf16.msra.mxu0 %v187
    %205 = vmatprep.subr.bf16.mxu0 0
    %206 = vmatpush1.bf16.msra.mxu0 %v188
    %207 = vmatprep.subr.bf16.mxu0 0
    %208 = vmatpush1.bf16.msra.mxu0 %v189
    %209 = vmatprep.subr.bf16.mxu0 0
    %210 = vmatpush1.bf16.msra.mxu0 %v190
    %211 = vmatprep.subr.bf16.mxu0 0
    %212 = vmatpush1.bf16.msra.mxu0 %v191
    %213 = vmatprep.subr.bf16.mxu0 0
    %214 = vmatpush1.bf16.msra.mxu0 %v192
    %215 = vmatprep.subr.bf16.mxu0 0
    %216 = vmatpush1.bf16.msra.mxu0 %v193
    %217 = vmatprep.subr.bf16.mxu0 0
    %218 = vmatpush1.bf16.msra.mxu0 %v194
    %219 = vmatprep.subr.bf16.mxu0 0
    %220 = vmatpush1.bf16.msra.mxu0 0
    %221 = vmatprep.subr.bf16.mxu0 0
    %222 = vmatpush1.bf16.msra.mxu0 0
    %223 = vmatprep.subr.bf16.mxu0 0
    %224 = vmatpush1.bf16.msra.mxu0 0
    %225 = vmatprep.subr.bf16.mxu0 0
    %226 = vmatpush1.bf16.msra.mxu0 0
    %227 = vmatprep.subr.bf16.mxu0 0
    %228 = vmatpush1.bf16.msra.mxu0 0
    %229 = vmatprep.subr.bf16.mxu0 0
    %230 = vmatpush1.bf16.msra.mxu0 0
    %231 = vmatprep.subr.bf16.mxu0 0
    %232 = vmatpush1.bf16.msra.mxu0 0
    %233 = vmatprep.subr.bf16.mxu0 0
    %234 = vmatpush1.bf16.msra.mxu0 0
    %235 = vmatprep.mubr.bf16.mxu0 0
    %236 = vmatmul.mubr.bf16.gmra.mrb[0].mxu0 %v154
    %v237 = vpop.f32.mrb[0].mxu0
    %v238 = vadd.f32 0.0, %v237
    %v239 = vpop.f32.mrb[0].mxu0
    %v240 = vpop.f32.mrb[0].mxu0
    %v241 = vpop.f32.mrb[0].mxu0
    %242 = vdwg.mxu0
    %v243 = vadd.f32 %v131, %v238
    %v244 = vtanh.pop %v243
    %s245 = scalar_lea.vmem [#allocation11], 8
    %246 = vst [vmem:[%s245] sm:$0xff] %v244
    %v247 = vpack.c.bf16 %v244, %v244
    %248 = vmatprep.subr.bf16.mxu0 0
    %249 = vmatpush1.bf16.msra.mxu0 %v187
    %250 = vmatprep.subr.bf16.mxu0 0
    %251 = vmatpush1.bf16.msra.mxu0 %v188
    %252 = vmatprep.subr.bf16.mxu0 0
    %253 = vmatpush1.bf16.msra.mxu0 %v189
    %254 = vmatprep.subr.bf16.mxu0 0
    %255 = vmatpush1.bf16.msra.mxu0 %v190
    %256 = vmatprep.subr.bf16.mxu0 0
    %257 = vmatpush1.bf16.msra.mxu0 %v191
    %258 = vmatprep.subr.bf16.mxu0 0
    %259 = vmatpush1.bf16.msra.mxu0 %v192
    %260 = vmatprep.subr.bf16.mxu0 0
    %261 = vmatpush1.bf16.msra.mxu0 %v193
    %262 = vmatprep.subr.bf16.mxu0 0
    %263 = vmatpush1.bf16.msra.mxu0 %v194
    %264 = vmatprep.subr.bf16.mxu0 0
    %265 = vmatpush1.bf16.msra.mxu0 0
    %266 = vmatprep.subr.bf16.mxu0 0
    %267 = vmatpush1.bf16.msra.mxu0 0
    %268 = vmatprep.subr.bf16.mxu0 0
    %269 = vmatpush1.bf16.msra.mxu0 0
    %270 = vmatprep.subr.bf16.mxu0 0
    %271 = vmatpush1.bf16.msra.mxu0 0
    %272 = vmatprep.subr.bf16.mxu0 0
    %273 = vmatpush1.bf16.msra.mxu0 0
    %274 = vmatprep.subr.bf16.mxu0 0
    %275 = vmatpush1.bf16.msra.mxu0 0
    %276 = vmatprep.subr.bf16.mxu0 0
    %277 = vmatpush1.bf16.msra.mxu0 0
    %278 = vmatprep.subr.bf16.mxu0 0
    %279 = vmatpush1.bf16.msra.mxu0 0
    %280 = vmatprep.mubr.bf16.mxu0 0
    %281 = vmatmul.mubr.bf16.gmra.mrb[0].mxu0 %v247
    %v282 = vpop.f32.mrb[0].mxu0
    %v283 = vadd.f32 0.0, %v282
    %v284 = vpop.f32.mrb[0].mxu0
    %v285 = vpop.f32.mrb[0].mxu0
    %v286 = vpop.f32.mrb[0].mxu0
    %287 = vdwg.mxu0
    %v288 = vadd.f32 %v131, %v283
    %v289 = vtanh.pop %v288
    %s290 = scalar_lea.vmem [#allocation11], 16
    %291 = vst [vmem:[%s290] sm:$0xff] %v289
    %v292 = vpack.c.bf16 %v289, %v289
    %293 = vmatprep.subr.bf16.mxu0 0
    %294 = vmatpush1.bf16.msra.mxu0 %v187
    %295 = vmatprep.subr.bf16.mxu0 0
    %296 = vmatpush1.bf16.msra.mxu0 %v188
    %297 = vmatprep.subr.bf16.mxu0 0
    %298 = vmatpush1.bf16.msra.mxu0 %v189
    %299 = vmatprep.subr.bf16.mxu0 0
    %300 = vmatpush1.bf16.msra.mxu0 %v190
    %301 = vmatprep.subr.bf16.mxu0 0
    %302 = vmatpush1.bf16.msra.mxu0 %v191
    %303 = vmatprep.subr.bf16.mxu0 0
    %304 = vmatpush1.bf16.msra.mxu0 %v192
    %305 = vmatprep.subr.bf16.mxu0 0
    %306 = vmatpush1.bf16.msra.mxu0 %v193
    %307 = vmatprep.subr.bf16.mxu0 0
    %308 = vmatpush1.bf16.msra.mxu0 %v194
    %309 = vmatprep.subr.bf16.mxu0 0
    %310 = vmatpush1.bf16.msra.mxu0 0
    %311 = vmatprep.subr.bf16.mxu0 0
    %312 = vmatpush1.bf16.msra.mxu0 0
    %313 = vmatprep.subr.bf16.mxu0 0
    %314 = vmatpush1.bf16.msra.mxu0 0
    %315 = vmatprep.subr.bf16.mxu0 0
    %316 = vmatpush1.bf16.msra.mxu0 0
    %317 = vmatprep.subr.bf16.mxu0 0
    %318 = vmatpush1.bf16.msra.mxu0 0
    %319 = vmatprep.subr.bf16.mxu0 0
    %320 = vmatpush1.bf16.msra.mxu0 0
    %321 = vmatprep.subr.bf16.mxu0 0
    %322 = vmatpush1.bf16.msra.mxu0 0
    %323 = vmatprep.subr.bf16.mxu0 0
    %324 = vmatpush1.bf16.msra.mxu0 0
    %325 = vmatprep.mubr.bf16.mxu0 0
    %326 = vmatmul.mubr.bf16.gmra.mrb[0].mxu0 %v292
    %v327 = vpop.f32.mrb[0].mxu0
    %v328 = vadd.f32 0.0, %v327
    %v329 = vpop.f32.mrb[0].mxu0
    %v330 = vpop.f32.mrb[0].mxu0
    %v331 = vpop.f32.mrb[0].mxu0
    %332 = vdwg.mxu0
    %v333 = vadd.f32 %v131, %v328
    %v334 = vtanh.pop %v333
    %s335 = scalar_lea.vmem [#allocation11], 24
    %336 = vst [vmem:[%s335] sm:$0xff] %v334
    %v337 = vpack.c.bf16 %v334, %v334
    %338 = vmatprep.subr.bf16.mxu0 0
    %339 = vmatpush1.bf16.msra.mxu0 %v187
    %340 = vmatprep.subr.bf16.mxu0 0
    %341 = vmatpush1.bf16.msra.mxu0 %v188
    %342 = vmatprep.subr.bf16.mxu0 0
    %343 = vmatpush1.bf16.msra.mxu0 %v189
    %344 = vmatprep.subr.bf16.mxu0 0
    %345 = vmatpush1.bf16.msra.mxu0 %v190
    %346 = vmatprep.subr.bf16.mxu0 0
    %347 = vmatpush1.bf16.msra.mxu0 %v191
    %348 = vmatprep.subr.bf16.mxu0 0
    %349 = vmatpush1.bf16.msra.mxu0 %v192
    %350 = vmatprep.subr.bf16.mxu0 0
    %351 = vmatpush1.bf16.msra.mxu0 %v193
    %352 = vmatprep.subr.bf16.mxu0 0
    %353 = vmatpush1.bf16.msra.mxu0 %v194
    %354 = vmatprep.subr.bf16.mxu0 0
    %355 = vmatpush1.bf16.msra.mxu0 0
    %356 = vmatprep.subr.bf16.mxu0 0
    %357 = vmatpush1.bf16.msra.mxu0 0
    %358 = vmatprep.subr.bf16.mxu0 0
    %359 = vmatpush1.bf16.msra.mxu0 0
    %360 = vmatprep.subr.bf16.mxu0 0
    %361 = vmatpush1.bf16.msra.mxu0 0
    %362 = vmatprep.subr.bf16.mxu0 0
    %363 = vmatpush1.bf16.msra.mxu0 0
    %364 = vmatprep.subr.bf16.mxu0 0
    %365 = vmatpush1.bf16.msra.mxu0 0
    %366 = vmatprep.subr.bf16.mxu0 0
    %367 = vmatpush1.bf16.msra.mxu0 0
    %368 = vmatprep.subr.bf16.mxu0 0
    %369 = vmatpush1.bf16.msra.mxu0 0
    %370 = vmatprep.mubr.bf16.mxu0 0
    %371 = vmatmul.mubr.bf16.gmra.mrb[0].mxu0 %v337
    %v372 = vpop.f32.mrb[0].mxu0
    %v373 = vadd.f32 0.0, %v372
    %v374 = vpop.f32.mrb[0].mxu0
    %v375 = vpop.f32.mrb[0].mxu0
    %v376 = vpop.f32.mrb[0].mxu0
    %377 = vdwg.mxu0
    %v378 = vadd.f32 %v131, %v373
    %v379 = vtanh.pop %v378
    %s380 = scalar_lea.vmem [#allocation11], 32
    %381 = vst [vmem:[%s380] sm:$0xff] %v379
    %v382 = vpack.c.bf16 %v379, %v379
    %383 = vmatprep.subr.bf16.mxu0 0
    %384 = vmatpush1.bf16.msra.mxu0 %v187
    %385 = vmatprep.subr.bf16.mxu0 0
    %386 = vmatpush1.bf16.msra.mxu0 %v188
    %387 = vmatprep.subr.bf16.mxu0 0
    %388 = vmatpush1.bf16.msra.mxu0 %v189
    %389 = vmatprep.subr.bf16.mxu0 0
    %390 = vmatpush1.bf16.msra.mxu0 %v190
    %391 = vmatprep.subr.bf16.mxu0 0
    %392 = vmatpush1.bf16.msra.mxu0 %v191
    %393 = vmatprep.subr.bf16.mxu0 0
    %394 = vmatpush1.bf16.msra.mxu0 %v192
    %395 = vmatprep.subr.bf16.mxu0 0
    %396 = vmatpush1.bf16.msra.mxu0 %v193
    %397 = vmatprep.subr.bf16.mxu0 0
    %398 = vmatpush1.bf16.msra.mxu0 %v194
    %399 = vmatprep.subr.bf16.mxu0 0
    %400 = vmatpush1.bf16.msra.mxu0 0
    %401 = vmatprep.subr.bf16.mxu0 0
    %402 = vmatpush1.bf16.msra.mxu0 0
    %403 = vmatprep.subr.bf16.mxu0 0
    %404 = vmatpush1.bf16.msra.mxu0 0
    %405 = vmatprep.subr.bf16.mxu0 0
    %406 = vmatpush1.bf16.msra.mxu0 0
    %407 = vmatprep.subr.bf16.mxu0 0
    %408 = vmatpush1.bf16.msra.mxu0 0
    %409 = vmatprep.subr.bf16.mxu0 0
    %410 = vmatpush1.bf16.msra.mxu0 0
    %411 = vmatprep.subr.bf16.mxu0 0
    %412 = vmatpush1.bf16.msra.mxu0 0
    %413 = vmatprep.subr.bf16.mxu0 0
    %414 = vmatpush1.bf16.msra.mxu0 0
    %415 = vmatprep.mubr.bf16.mxu0 0
    %416 = vmatmul.mubr.bf16.gmra.mrb[0].mxu0 %v382
    %v417 = vpop.f32.mrb[0].mxu0
    %v418 = vadd.f32 0.0, %v417
    %v419 = vpop.f32.mrb[0].mxu0
    %v420 = vpop.f32.mrb[0].mxu0
    %v421 = vpop.f32.mrb[0].mxu0
    %422 = vdwg.mxu0
    %v423 = vadd.f32 %v131, %v418
    %v424 = vtanh.pop %v423
    %s425 = scalar_lea.vmem [#allocation11], 40
    %426 = vst [vmem:[%s425] sm:$0xff] %v424
    %v427 = vpack.c.bf16 %v424, %v424
    %428 = vmatprep.subr.bf16.mxu0 0
    %429 = vmatpush1.bf16.msra.mxu0 %v187
    %430 = vmatprep.subr.bf16.mxu0 0
    %431 = vmatpush1.bf16.msra.mxu0 %v188
    %432 = vmatprep.subr.bf16.mxu0 0
    %433 = vmatpush1.bf16.msra.mxu0 %v189
    %434 = vmatprep.subr.bf16.mxu0 0
    %435 = vmatpush1.bf16.msra.mxu0 %v190
    %436 = vmatprep.subr.bf16.mxu0 0
    %437 = vmatpush1.bf16.msra.mxu0 %v191
    %438 = vmatprep.subr.bf16.mxu0 0
    %439 = vmatpush1.bf16.msra.mxu0 %v192
    %440 = vmatprep.subr.bf16.mxu0 0
    %441 = vmatpush1.bf16.msra.mxu0 %v193
    %442 = vmatprep.subr.bf16.mxu0 0
    %443 = vmatpush1.bf16.msra.mxu0 %v194
    %444 = vmatprep.subr.bf16.mxu0 0
    %445 = vmatpush1.bf16.msra.mxu0 0
    %446 = vmatprep.subr.bf16.mxu0 0
    %447 = vmatpush1.bf16.msra.mxu0 0
    %448 = vmatprep.subr.bf16.mxu0 0
    %449 = vmatpush1.bf16.msra.mxu0 0
    %450 = vmatprep.subr.bf16.mxu0 0
    %451 = vmatpush1.bf16.msra.mxu0 0
    %452 = vmatprep.subr.bf16.mxu0 0
    %453 = vmatpush1.bf16.msra.mxu0 0
    %454 = vmatprep.subr.bf16.mxu0 0
    %455 = vmatpush1.bf16.msra.mxu0 0
    %456 = vmatprep.subr.bf16.mxu0 0
    %457 = vmatpush1.bf16.msra.mxu0 0
    %458 = vmatprep.subr.bf16.mxu0 0
    %459 = vmatpush1.bf16.msra.mxu0 0
    %460 = vmatprep.mubr.bf16.mxu0 0
    %461 = vmatmul.mubr.bf16.gmra.mrb[0].mxu0 %v427
    %v462 = vpop.f32.mrb[0].mxu0
    %v463 = vadd.f32 0.0, %v462
    %v464 = vpop.f32.mrb[0].mxu0
    %v465 = vpop.f32.mrb[0].mxu0
    %v466 = vpop.f32.mrb[0].mxu0
    %467 = vdwg.mxu0
    %v468 = vadd.f32 %v131, %v463
    %v469 = vtanh.pop %v468
    %s470 = scalar_lea.vmem [#allocation11], 48
    %471 = vst [vmem:[%s470] sm:$0xff] %v469
    %v472 = vpack.c.bf16 %v469, %v469
    %473 = vmatprep.subr.bf16.mxu0 0
    %474 = vmatpush1.bf16.msra.mxu0 %v187
    %475 = vmatprep.subr.bf16.mxu0 0
    %476 = vmatpush1.bf16.msra.mxu0 %v188
    %477 = vmatprep.subr.bf16.mxu0 0
    %478 = vmatpush1.bf16.msra.mxu0 %v189
    %479 = vmatprep.subr.bf16.mxu0 0
    %480 = vmatpush1.bf16.msra.mxu0 %v190
    %481 = vmatprep.subr.bf16.mxu0 0
    %482 = vmatpush1.bf16.msra.mxu0 %v191
    %483 = vmatprep.subr.bf16.mxu0 0
    %484 = vmatpush1.bf16.msra.mxu0 %v192
    %485 = vmatprep.subr.bf16.mxu0 0
    %486 = vmatpush1.bf16.msra.mxu0 %v193
    %487 = vmatprep.subr.bf16.mxu0 0
    %488 = vmatpush1.bf16.msra.mxu0 %v194
    %489 = vmatprep.subr.bf16.mxu0 0
    %490 = vmatpush1.bf16.msra.mxu0 0
    %491 = vmatprep.subr.bf16.mxu0 0
    %492 = vmatpush1.bf16.msra.mxu0 0
    %493 = vmatprep.subr.bf16.mxu0 0
    %494 = vmatpush1.bf16.msra.mxu0 0
    %495 = vmatprep.subr.bf16.mxu0 0
    %496 = vmatpush1.bf16.msra.mxu0 0
    %497 = vmatprep.subr.bf16.mxu0 0
    %498 = vmatpush1.bf16.msra.mxu0 0
    %499 = vmatprep.subr.bf16.mxu0 0
    %500 = vmatpush1.bf16.msra.mxu0 0
    %501 = vmatprep.subr.bf16.mxu0 0
    %502 = vmatpush1.bf16.msra.mxu0 0
    %503 = vmatprep.subr.bf16.mxu0 0
    %504 = vmatpush1.bf16.msra.mxu0 0
    %505 = vmatprep.mubr.bf16.mxu0 0
    %506 = vmatmul.mubr.bf16.gmra.mrb[0].mxu0 %v472
    %v507 = vpop.f32.mrb[0].mxu0
    %v508 = vadd.f32 0.0, %v507
    %v509 = vpop.f32.mrb[0].mxu0
    %v510 = vpop.f32.mrb[0].mxu0
    %v511 = vpop.f32.mrb[0].mxu0
    %512 = vdwg.mxu0
    %v513 = vadd.f32 %v131, %v508
    %v514 = vtanh.pop %v513
    %s515 = scalar_lea.vmem [#allocation11], 56
    %516 = vst [vmem:[%s515] sm:$0xff] %v514
    %v517 = vld [vmem:[#allocation8] sm:$0xf]
    %v518 = vld [vmem:[#allocation8 + $0x4] sm:$0xf]
    %v519 = vld [vmem:[#allocation8 + $0x8] sm:$0xf]
    %v520 = vld [vmem:[#allocation8 + $0xc] sm:$0xf]
    %v521 = vld [vmem:[#allocation8 + $0x10] sm:$0xf]
    %v522 = vld [vmem:[#allocation8 + $0x14] sm:$0xf]
    %v523 = vld [vmem:[#allocation8 + $0x18] sm:$0xf]
    %v524 = vld [vmem:[#allocation8 + $0x1c] sm:$0xf]
    %v525 = vld [vmem:[#allocation8 + $0x20] sm:$0xf]
    %v526 = vld [vmem:[#allocation8 + $0x24] sm:$0xf]
    %v527 = vld [vmem:[#allocation8 + $0x28] sm:$0xf]
    %v528 = vld [vmem:[#allocation8 + $0x2c] sm:$0xf]
    %v529 = vld [vmem:[#allocation8 + $0x30] sm:$0xf]
    %v530 = vld [vmem:[#allocation8 + $0x34] sm:$0xf]
    %v531 = vld [vmem:[#allocation8 + $0x38] sm:$0xf]
    %v532 = vld [vmem:[#allocation8 + $0x3c] sm:$0xf]
    %s533 = scalar_lea.vmem %s4, 1
    %v534 = vld [vmem:[%s533] sm:$0x1]
    %v535 = vld [vmem:[#allocation11] sm:$0xff]
    %v536 = vld [vmem:[#allocation11 + $0x8] sm:$0xff]
    %v537 = vld [vmem:[#allocation11 + $0x10] sm:$0xff]
    %v538 = vld [vmem:[#allocation11 + $0x18] sm:$0xff]
    %v539 = vld [vmem:[#allocation11 + $0x20] sm:$0xff]
    %v540 = vld [vmem:[#allocation11 + $0x28] sm:$0xff]
    %v541 = vld [vmem:[#allocation11 + $0x30] sm:$0xff]
    %v542 = vld [vmem:[#allocation11 + $0x38] sm:$0xff]
    %v543 = vpack.c.bf16 %v536, %v535
    %v544 = vpack.c.bf16 %v538, %v537
    %v545 = vpack.c.bf16 %v540, %v539
    %v546 = vpack.c.bf16 %v542, %v541
    %v548 = vlaneseq
    %v549 = vshrl.u32 %v548, 7
    %v550 = vsub.s32 0, %v549
    %v551 = vrot.slane %v534, %v550
    %v569 = vunpack.c.l.b16 %v517
    %v570 = vunpack.c.l.b16 %v518
    %v571 = vunpack.c.l.b16 %v519
    %v572 = vunpack.c.l.b16 %v520
    %v573 = vunpack.c.l.b16 %v521
    %v574 = vunpack.c.l.b16 %v522
    %v575 = vunpack.c.l.b16 %v523
    %v576 = vunpack.c.l.b16 %v524
    %v577 = vunpack.c.l.b16 %v525
    %v578 = vunpack.c.l.b16 %v526
    %v579 = vunpack.c.l.b16 %v527
    %v580 = vunpack.c.l.b16 %v528
    %v581 = vunpack.c.l.b16 %v529
    %v582 = vunpack.c.l.b16 %v530
    %v583 = vunpack.c.l.b16 %v531
    %v584 = vunpack.c.l.b16 %v532
    %v585 = vpack.c.b16 %v570, %v569
    %v586 = vpack.c.b16 %v572, %v571
    %v587 = vpack.c.b16 %v574, %v573
    %v588 = vpack.c.b16 %v576, %v575
    %v589 = vpack.c.b16 %v578, %v577
    %v590 = vpack.c.b16 %v580, %v579
    %v591 = vpack.c.b16 %v582, %v581
    %v592 = vpack.c.b16 %v584, %v583
    %601 = vmatprep.subr.bf16.mxu0 0
    %602 = vmatpush1.bf16.msra.mxu0 %v585
    %603 = vmatprep.subr.bf16.mxu0 0
    %604 = vmatpush1.bf16.msra.mxu0 %v586
    %605 = vmatprep.subr.bf16.mxu0 0
    %606 = vmatpush1.bf16.msra.mxu0 %v587
    %607 = vmatprep.subr.bf16.mxu0 0
    %608 = vmatpush1.bf16.msra.mxu0 %v588
    %609 = vmatprep.subr.bf16.mxu0 0
    %610 = vmatpush1.bf16.msra.mxu0 %v589
    %611 = vmatprep.subr.bf16.mxu0 0
    %612 = vmatpush1.bf16.msra.mxu0 %v590
    %613 = vmatprep.subr.bf16.mxu0 0
    %614 = vmatpush1.bf16.msra.mxu0 %v591
    %615 = vmatprep.subr.bf16.mxu0 0
    %616 = vmatpush1.bf16.msra.mxu0 %v592
    %617 = vmatprep.subr.bf16.mxu0 0
    %618 = vmatpush1.bf16.msra.mxu0 0
    %619 = vmatprep.subr.bf16.mxu0 0
    %620 = vmatpush1.bf16.msra.mxu0 0
    %621 = vmatprep.subr.bf16.mxu0 0
    %622 = vmatpush1.bf16.msra.mxu0 0
    %623 = vmatprep.subr.bf16.mxu0 0
    %624 = vmatpush1.bf16.msra.mxu0 0
    %625 = vmatprep.subr.bf16.mxu0 0
    %626 = vmatpush1.bf16.msra.mxu0 0
    %627 = vmatprep.subr.bf16.mxu0 0
    %628 = vmatpush1.bf16.msra.mxu0 0
    %629 = vmatprep.subr.bf16.mxu0 0
    %630 = vmatpush1.bf16.msra.mxu0 0
    %631 = vmatprep.subr.bf16.mxu0 0
    %632 = vmatpush1.bf16.msra.mxu0 0
    %633 = vmatprep.mubr.bf16.mxu0 0
    %634 = vmatmul.mubr.bf16.gmra.mrb[0].mxu0 %v543
    %v635 = vpop.f32.mrb[0].mxu0
    %v636 = vadd.f32 %v551, %v635
    %v637 = vpop.f32.mrb[0].mxu0
    %v638 = vpop.f32.mrb[0].mxu0
    %v639 = vadd.f32 %v551, %v638
    %v640 = vpop.f32.mrb[0].mxu0
    %641 = vmatprep.mubr.bf16.mxu0 0
    %642 = vmatmul.mubr.bf16.gmra.mrb[0].mxu0 %v544
    %v643 = vpop.f32.mrb[0].mxu0
    %v644 = vadd.f32 %v551, %v643
    %v645 = vpop.f32.mrb[0].mxu0
    %v646 = vpop.f32.mrb[0].mxu0
    %v647 = vadd.f32 %v551, %v646
    %v648 = vpop.f32.mrb[0].mxu0
    %649 = vmatprep.mubr.bf16.mxu0 0
    %650 = vmatmul.mubr.bf16.gmra.mrb[0].mxu0 %v545
    %v651 = vpop.f32.mrb[0].mxu0
    %v652 = vadd.f32 %v551, %v651
    %v653 = vpop.f32.mrb[0].mxu0
    %v654 = vpop.f32.mrb[0].mxu0
    %v655 = vadd.f32 %v551, %v654
    %v656 = vpop.f32.mrb[0].mxu0
    %657 = vmatprep.mubr.bf16.mxu0 0
    %658 = vmatmul.mubr.bf16.gmra.mrb[0].mxu0 %v546
    %v659 = vpop.f32.mrb[0].mxu0
    %v660 = vadd.f32 %v551, %v659
    %v661 = vpop.f32.mrb[0].mxu0
    %v662 = vpop.f32.mrb[0].mxu0
    %v663 = vadd.f32 %v551, %v662
    %v664 = vpop.f32.mrb[0].mxu0
    %665 = vdwg.mxu0
    %666 = vst [vmem:[#allocation2] sm:$0xff] %v636
    %667 = vst [vmem:[#allocation2 + $0x8] sm:$0xff] %v639
    %668 = vst [vmem:[#allocation2 + $0x10] sm:$0xff] %v644
    %669 = vst [vmem:[#allocation2 + $0x18] sm:$0xff] %v647
    %670 = vst [vmem:[#allocation2 + $0x20] sm:$0xff] %v652
    %671 = vst [vmem:[#allocation2 + $0x28] sm:$0xff] %v655
    %672 = vst [vmem:[#allocation2 + $0x30] sm:$0xff] %v660
    %673 = vst [vmem:[#allocation2 + $0x38] sm:$0xff] %v663
    %s674 = scalar_lea.vmem [#allocation9], 64
    %v675 = vld [vmem:[%s674] sm:$0xf]
    %v676 = vld [vmem:[%s674 + $0x4] sm:$0xf]
    %v677 = vld [vmem:[%s674 + $0x8] sm:$0xf]
    %v678 = vld [vmem:[%s674 + $0xc] sm:$0xf]
    %v679 = vld [vmem:[%s674 + $0x10] sm:$0xf]
    %v680 = vld [vmem:[%s674 + $0x14] sm:$0xf]
    %v681 = vld [vmem:[%s674 + $0x18] sm:$0xf]
    %v682 = vld [vmem:[%s674 + $0x1c] sm:$0xf]
    %v683 = vld [vmem:[%s674 + $0x20] sm:$0xf]
    %v684 = vld [vmem:[%s674 + $0x24] sm:$0xf]
    %v685 = vld [vmem:[%s674 + $0x28] sm:$0xf]
    %v686 = vld [vmem:[%s674 + $0x2c] sm:$0xf]
    %v687 = vld [vmem:[%s674 + $0x30] sm:$0xf]
    %v688 = vld [vmem:[%s674 + $0x34] sm:$0xf]
    %v689 = vld [vmem:[%s674 + $0x38] sm:$0xf]
    %v690 = vld [vmem:[%s674 + $0x3c] sm:$0xf]
    %v691 = vld [vmem:[#allocation2] sm:$0xff]
    %v692 = vtanh.pop %v691
    %693 = vst [vmem:[#allocation11] sm:$0xff] %v692
    %s694 = scalar_lea.vmem [#allocation2], 8
    %v695 = vld [vmem:[%s694] sm:$0xff]
    %v696 = vpack.c.bf16 %v692, %v692
    %v713 = vunpack.c.l.b16 %v675
    %v714 = vunpack.c.l.b16 %v676
    %v715 = vunpack.c.l.b16 %v677
    %v716 = vunpack.c.l.b16 %v678
    %v717 = vunpack.c.l.b16 %v679
    %v718 = vunpack.c.l.b16 %v680
    %v719 = vunpack.c.l.b16 %v681
    %v720 = vunpack.c.l.b16 %v682
    %v721 = vunpack.c.l.b16 %v683
    %v722 = vunpack.c.l.b16 %v684
    %v723 = vunpack.c.l.b16 %v685
    %v724 = vunpack.c.l.b16 %v686
    %v725 = vunpack.c.l.b16 %v687
    %v726 = vunpack.c.l.b16 %v688
    %v727 = vunpack.c.l.b16 %v689
    %v728 = vunpack.c.l.b16 %v690
    %v729 = vpack.c.b16 %v714, %v713
    %v730 = vpack.c.b16 %v716, %v715
    %v731 = vpack.c.b16 %v718, %v717
    %v732 = vpack.c.b16 %v720, %v719
    %v733 = vpack.c.b16 %v722, %v721
    %v734 = vpack.c.b16 %v724, %v723
    %v735 = vpack.c.b16 %v726, %v725
    %v736 = vpack.c.b16 %v728, %v727
    %745 = vmatprep.subr.bf16.mxu0 0
    %746 = vmatpush1.bf16.msra.mxu0 %v729
    %747 = vmatprep.subr.bf16.mxu0 0
    %748 = vmatpush1.bf16.msra.mxu0 %v730
    %749 = vmatprep.subr.bf16.mxu0 0
    %750 = vmatpush1.bf16.msra.mxu0 %v731
    %751 = vmatprep.subr.bf16.mxu0 0
    %752 = vmatpush1.bf16.msra.mxu0 %v732
    %753 = vmatprep.subr.bf16.mxu0 0
    %754 = vmatpush1.bf16.msra.mxu0 %v733
    %755 = vmatprep.subr.bf16.mxu0 0
    %756 = vmatpush1.bf16.msra.mxu0 %v734
    %757 = vmatprep.subr.bf16.mxu0 0
    %758 = vmatpush1.bf16.msra.mxu0 %v735
    %759 = vmatprep.subr.bf16.mxu0 0
    %760 = vmatpush1.bf16.msra.mxu0 %v736
    %761 = vmatprep.subr.bf16.mxu0 0
    %762 = vmatpush1.bf16.msra.mxu0 0
    %763 = vmatprep.subr.bf16.mxu0 0
    %764 = vmatpush1.bf16.msra.mxu0 0
    %765 = vmatprep.subr.bf16.mxu0 0
    %766 = vmatpush1.bf16.msra.mxu0 0
    %767 = vmatprep.subr.bf16.mxu0 0
    %768 = vmatpush1.bf16.msra.mxu0 0
    %769 = vmatprep.subr.bf16.mxu0 0
    %770 = vmatpush1.bf16.msra.mxu0 0
    %771 = vmatprep.subr.bf16.mxu0 0
    %772 = vmatpush1.bf16.msra.mxu0 0
    %773 = vmatprep.subr.bf16.mxu0 0
    %774 = vmatpush1.bf16.msra.mxu0 0
    %775 = vmatprep.subr.bf16.mxu0 0
    %776 = vmatpush1.bf16.msra.mxu0 0
    %777 = vmatprep.mubr.bf16.mxu0 0
    %778 = vmatmul.mubr.bf16.gmra.mrb[0].mxu0 %v696
    %v779 = vpop.f32.mrb[0].mxu0
    %v780 = vadd.f32 0.0, %v779
    %v781 = vpop.f32.mrb[0].mxu0
    %v782 = vpop.f32.mrb[0].mxu0
    %v783 = vpop.f32.mrb[0].mxu0
    %784 = vdwg.mxu0
    %v785 = vadd.f32 %v695, %v780
    %v786 = vtanh.pop %v785
    %787 = vst [vmem:[%s245] sm:$0xff] %v786
    %s788 = scalar_lea.vmem [#allocation2], 16
    %v789 = vld [vmem:[%s788] sm:$0xff]
    %v790 = vpack.c.bf16 %v786, %v786
    %791 = vmatprep.subr.bf16.mxu0 0
    %792 = vmatpush1.bf16.msra.mxu0 %v729
    %793 = vmatprep.subr.bf16.mxu0 0
    %794 = vmatpush1.bf16.msra.mxu0 %v730
    %795 = vmatprep.subr.bf16.mxu0 0
    %796 = vmatpush1.bf16.msra.mxu0 %v731
    %797 = vmatprep.subr.bf16.mxu0 0
    %798 = vmatpush1.bf16.msra.mxu0 %v732
    %799 = vmatprep.subr.bf16.mxu0 0
    %800 = vmatpush1.bf16.msra.mxu0 %v733
    %801 = vmatprep.subr.bf16.mxu0 0
    %802 = vmatpush1.bf16.msra.mxu0 %v734
    %803 = vmatprep.subr.bf16.mxu0 0
    %804 = vmatpush1.bf16.msra.mxu0 %v735
    %805 = vmatprep.subr.bf16.mxu0 0
    %806 = vmatpush1.bf16.msra.mxu0 %v736
    %807 = vmatprep.subr.bf16.mxu0 0
    %808 = vmatpush1.bf16.msra.mxu0 0
    %809 = vmatprep.subr.bf16.mxu0 0
    %810 = vmatpush1.bf16.msra.mxu0 0
    %811 = vmatprep.subr.bf16.mxu0 0
    %812 = vmatpush1.bf16.msra.mxu0 0
    %813 = vmatprep.subr.bf16.mxu0 0
    %814 = vmatpush1.bf16.msra.mxu0 0
    %815 = vmatprep.subr.bf16.mxu0 0
    %816 = vmatpush1.bf16.msra.mxu0 0
    %817 = vmatprep.subr.bf16.mxu0 0
    %818 = vmatpush1.bf16.msra.mxu0 0
    %819 = vmatprep.subr.bf16.mxu0 0
    %820 = vmatpush1.bf16.msra.mxu0 0
    %821 = vmatprep.subr.bf16.mxu0 0
    %822 = vmatpush1.bf16.msra.mxu0 0
    %823 = vmatprep.mubr.bf16.mxu0 0
    %824 = vmatmul.mubr.bf16.gmra.mrb[0].mxu0 %v790
    %v825 = vpop.f32.mrb[0].mxu0
    %v826 = vadd.f32 0.0, %v825
    %v827 = vpop.f32.mrb[0].mxu0
    %v828 = vpop.f32.mrb[0].mxu0
    %v829 = vpop.f32.mrb[0].mxu0
    %830 = vdwg.mxu0
    %v831 = vadd.f32 %v789, %v826
    %v832 = vtanh.pop %v831
    %833 = vst [vmem:[%s290] sm:$0xff] %v832
    %s834 = scalar_lea.vmem [#allocation2], 24
    %v835 = vld [vmem:[%s834] sm:$0xff]
    %v836 = vpack.c.bf16 %v832, %v832
    %837 = vmatprep.subr.bf16.mxu0 0
    %838 = vmatpush1.bf16.msra.mxu0 %v729
    %839 = vmatprep.subr.bf16.mxu0 0
    %840 = vmatpush1.bf16.msra.mxu0 %v730
    %841 = vmatprep.subr.bf16.mxu0 0
    %842 = vmatpush1.bf16.msra.mxu0 %v731
    %843 = vmatprep.subr.bf16.mxu0 0
    %844 = vmatpush1.bf16.msra.mxu0 %v732
    %845 = vmatprep.subr.bf16.mxu0 0
    %846 = vmatpush1.bf16.msra.mxu0 %v733
    %847 = vmatprep.subr.bf16.mxu0 0
    %848 = vmatpush1.bf16.msra.mxu0 %v734
    %849 = vmatprep.subr.bf16.mxu0 0
    %850 = vmatpush1.bf16.msra.mxu0 %v735
    %851 = vmatprep.subr.bf16.mxu0 0
    %852 = vmatpush1.bf16.msra.mxu0 %v736
    %853 = vmatprep.subr.bf16.mxu0 0
    %854 = vmatpush1.bf16.msra.mxu0 0
    %855 = vmatprep.subr.bf16.mxu0 0
    %856 = vmatpush1.bf16.msra.mxu0 0
    %857 = vmatprep.subr.bf16.mxu0 0
    %858 = vmatpush1.bf16.msra.mxu0 0
    %859 = vmatprep.subr.bf16.mxu0 0
    %860 = vmatpush1.bf16.msra.mxu0 0
    %861 = vmatprep.subr.bf16.mxu0 0
    %862 = vmatpush1.bf16.msra.mxu0 0
    %863 = vmatprep.subr.bf16.mxu0 0
    %864 = vmatpush1.bf16.msra.mxu0 0
    %865 = vmatprep.subr.bf16.mxu0 0
    %866 = vmatpush1.bf16.msra.mxu0 0
    %867 = vmatprep.subr.bf16.mxu0 0
    %868 = vmatpush1.bf16.msra.mxu0 0
    %869 = vmatprep.mubr.bf16.mxu0 0
    %870 = vmatmul.mubr.bf16.gmra.mrb[0].mxu0 %v836
    %v871 = vpop.f32.mrb[0].mxu0
    %v872 = vadd.f32 0.0, %v871
    %v873 = vpop.f32.mrb[0].mxu0
    %v874 = vpop.f32.mrb[0].mxu0
    %v875 = vpop.f32.mrb[0].mxu0
    %876 = vdwg.mxu0
    %v877 = vadd.f32 %v835, %v872
    %v878 = vtanh.pop %v877
    %879 = vst [vmem:[%s335] sm:$0xff] %v878
    %s880 = scalar_lea.vmem [#allocation2], 32
    %v881 = vld [vmem:[%s880] sm:$0xff]
    %v882 = vpack.c.bf16 %v878, %v878
    %883 = vmatprep.subr.bf16.mxu0 0
    %884 = vmatpush1.bf16.msra.mxu0 %v729
    %885 = vmatprep.subr.bf16.mxu0 0
    %886 = vmatpush1.bf16.msra.mxu0 %v730
    %887 = vmatprep.subr.bf16.mxu0 0
    %888 = vmatpush1.bf16.msra.mxu0 %v731
    %889 = vmatprep.subr.bf16.mxu0 0
    %890 = vmatpush1.bf16.msra.mxu0 %v732
    %891 = vmatprep.subr.bf16.mxu0 0
    %892 = vmatpush1.bf16.msra.mxu0 %v733
    %893 = vmatprep.subr.bf16.mxu0 0
    %894 = vmatpush1.bf16.msra.mxu0 %v734
    %895 = vmatprep.subr.bf16.mxu0 0
    %896 = vmatpush1.bf16.msra.mxu0 %v735
    %897 = vmatprep.subr.bf16.mxu0 0
    %898 = vmatpush1.bf16.msra.mxu0 %v736
    %899 = vmatprep.subr.bf16.mxu0 0
    %900 = vmatpush1.bf16.msra.mxu0 0
    %901 = vmatprep.subr.bf16.mxu0 0
    %902 = vmatpush1.bf16.msra.mxu0 0
    %903 = vmatprep.subr.bf16.mxu0 0
    %904 = vmatpush1.bf16.msra.mxu0 0
    %905 = vmatprep.subr.bf16.mxu0 0
    %906 = vmatpush1.bf16.msra.mxu0 0
    %907 = vmatprep.subr.bf16.mxu0 0
    %908 = vmatpush1.bf16.msra.mxu0 0
    %909 = vmatprep.subr.bf16.mxu0 0
    %910 = vmatpush1.bf16.msra.mxu0 0
    %911 = vmatprep.subr.bf16.mxu0 0
    %912 = vmatpush1.bf16.msra.mxu0 0
    %913 = vmatprep.subr.bf16.mxu0 0
    %914 = vmatpush1.bf16.msra.mxu0 0
    %915 = vmatprep.mubr.bf16.mxu0 0
    %916 = vmatmul.mubr.bf16.gmra.mrb[0].mxu0 %v882
    %v917 = vpop.f32.mrb[0].mxu0
    %v918 = vadd.f32 0.0, %v917
    %v919 = vpop.f32.mrb[0].mxu0
    %v920 = vpop.f32.mrb[0].mxu0
    %v921 = vpop.f32.mrb[0].mxu0
    %922 = vdwg.mxu0
    %v923 = vadd.f32 %v881, %v918
    %v924 = vtanh.pop %v923
    %925 = vst [vmem:[%s380] sm:$0xff] %v924
    %s926 = scalar_lea.vmem [#allocation2], 40
    %v927 = vld [vmem:[%s926] sm:$0xff]
    %v928 = vpack.c.bf16 %v924, %v924
    %929 = vmatprep.subr.bf16.mxu0 0
    %930 = vmatpush1.bf16.msra.mxu0 %v729
    %931 = vmatprep.subr.bf16.mxu0 0
    %932 = vmatpush1.bf16.msra.mxu0 %v730
    %933 = vmatprep.subr.bf16.mxu0 0
    %934 = vmatpush1.bf16.msra.mxu0 %v731
    %935 = vmatprep.subr.bf16.mxu0 0
    %936 = vmatpush1.bf16.msra.mxu0 %v732
    %937 = vmatprep.subr.bf16.mxu0 0
    %938 = vmatpush1.bf16.msra.mxu0 %v733
    %939 = vmatprep.subr.bf16.mxu0 0
    %940 = vmatpush1.bf16.msra.mxu0 %v734
    %941 = vmatprep.subr.bf16.mxu0 0
    %942 = vmatpush1.bf16.msra.mxu0 %v735
    %943 = vmatprep.subr.bf16.mxu0 0
    %944 = vmatpush1.bf16.msra.mxu0 %v736
    %945 = vmatprep.subr.bf16.mxu0 0
    %946 = vmatpush1.bf16.msra.mxu0 0
    %947 = vmatprep.subr.bf16.mxu0 0
    %948 = vmatpush1.bf16.msra.mxu0 0
    %949 = vmatprep.subr.bf16.mxu0 0
    %950 = vmatpush1.bf16.msra.mxu0 0
    %951 = vmatprep.subr.bf16.mxu0 0
    %952 = vmatpush1.bf16.msra.mxu0 0
    %953 = vmatprep.subr.bf16.mxu0 0
    %954 = vmatpush1.bf16.msra.mxu0 0
    %955 = vmatprep.subr.bf16.mxu0 0
    %956 = vmatpush1.bf16.msra.mxu0 0
    %957 = vmatprep.subr.bf16.mxu0 0
    %958 = vmatpush1.bf16.msra.mxu0 0
    %959 = vmatprep.subr.bf16.mxu0 0
    %960 = vmatpush1.bf16.msra.mxu0 0
    %961 = vmatprep.mubr.bf16.mxu0 0
    %962 = vmatmul.mubr.bf16.gmra.mrb[0].mxu0 %v928
    %v963 = vpop.f32.mrb[0].mxu0
    %v964 = vadd.f32 0.0, %v963
    %v965 = vpop.f32.mrb[0].mxu0
    %v966 = vpop.f32.mrb[0].mxu0
    %v967 = vpop.f32.mrb[0].mxu0
    %968 = vdwg.mxu0
    %v969 = vadd.f32 %v927, %v964
    %v970 = vtanh.pop %v969
    %971 = vst [vmem:[%s425] sm:$0xff] %v970
    %s972 = scalar_lea.vmem [#allocation2], 48
    %v973 = vld [vmem:[%s972] sm:$0xff]
    %v974 = vpack.c.bf16 %v970, %v970
    %975 = vmatprep.subr.bf16.mxu0 0
    %976 = vmatpush1.bf16.msra.mxu0 %v729
    %977 = vmatprep.subr.bf16.mxu0 0
    %978 = vmatpush1.bf16.msra.mxu0 %v730
    %979 = vmatprep.subr.bf16.mxu0 0
    %980 = vmatpush1.bf16.msra.mxu0 %v731
    %981 = vmatprep.subr.bf16.mxu0 0
    %982 = vmatpush1.bf16.msra.mxu0 %v732
    %983 = vmatprep.subr.bf16.mxu0 0
    %984 = vmatpush1.bf16.msra.mxu0 %v733
    %985 = vmatprep.subr.bf16.mxu0 0
    %986 = vmatpush1.bf16.msra.mxu0 %v734
    %987 = vmatprep.subr.bf16.mxu0 0
    %988 = vmatpush1.bf16.msra.mxu0 %v735
    %989 = vmatprep.subr.bf16.mxu0 0
    %990 = vmatpush1.bf16.msra.mxu0 %v736
    %991 = vmatprep.subr.bf16.mxu0 0
    %992 = vmatpush1.bf16.msra.mxu0 0
    %993 = vmatprep.subr.bf16.mxu0 0
    %994 = vmatpush1.bf16.msra.mxu0 0
    %995 = vmatprep.subr.bf16.mxu0 0
    %996 = vmatpush1.bf16.msra.mxu0 0
    %997 = vmatprep.subr.bf16.mxu0 0
    %998 = vmatpush1.bf16.msra.mxu0 0
    %999 = vmatprep.subr.bf16.mxu0 0
    %1000 = vmatpush1.bf16.msra.mxu0 0
    %1001 = vmatprep.subr.bf16.mxu0 0
    %1002 = vmatpush1.bf16.msra.mxu0 0
    %1003 = vmatprep.subr.bf16.mxu0 0
    %1004 = vmatpush1.bf16.msra.mxu0 0
    %1005 = vmatprep.subr.bf16.mxu0 0
    %1006 = vmatpush1.bf16.msra.mxu0 0
    %1007 = vmatprep.mubr.bf16.mxu0 0
    %1008 = vmatmul.mubr.bf16.gmra.mrb[0].mxu0 %v974
    %v1009 = vpop.f32.mrb[0].mxu0
    %v1010 = vadd.f32 0.0, %v1009
    %v1011 = vpop.f32.mrb[0].mxu0
    %v1012 = vpop.f32.mrb[0].mxu0
    %v1013 = vpop.f32.mrb[0].mxu0
    %1014 = vdwg.mxu0
    %v1015 = vadd.f32 %v973, %v1010
    %v1016 = vtanh.pop %v1015
    %1017 = vst [vmem:[%s470] sm:$0xff] %v1016
    %s1018 = scalar_lea.vmem [#allocation2], 56
    %v1019 = vld [vmem:[%s1018] sm:$0xff]
    %v1020 = vpack.c.bf16 %v1016, %v1016
    %1021 = vmatprep.subr.bf16.mxu0 0
    %1022 = vmatpush1.bf16.msra.mxu0 %v729
    %1023 = vmatprep.subr.bf16.mxu0 0
    %1024 = vmatpush1.bf16.msra.mxu0 %v730
    %1025 = vmatprep.subr.bf16.mxu0 0
    %1026 = vmatpush1.bf16.msra.mxu0 %v731
    %1027 = vmatprep.subr.bf16.mxu0 0
    %1028 = vmatpush1.bf16.msra.mxu0 %v732
    %1029 = vmatprep.subr.bf16.mxu0 0
    %1030 = vmatpush1.bf16.msra.mxu0 %v733
    %1031 = vmatprep.subr.bf16.mxu0 0
    %1032 = vmatpush1.bf16.msra.mxu0 %v734
    %1033 = vmatprep.subr.bf16.mxu0 0
    %1034 = vmatpush1.bf16.msra.mxu0 %v735
    %1035 = vmatprep.subr.bf16.mxu0 0
    %1036 = vmatpush1.bf16.msra.mxu0 %v736
    %1037 = vmatprep.subr.bf16.mxu0 0
    %1038 = vmatpush1.bf16.msra.mxu0 0
    %1039 = vmatprep.subr.bf16.mxu0 0
    %1040 = vmatpush1.bf16.msra.mxu0 0
    %1041 = vmatprep.subr.bf16.mxu0 0
    %1042 = vmatpush1.bf16.msra.mxu0 0
    %1043 = vmatprep.subr.bf16.mxu0 0
    %1044 = vmatpush1.bf16.msra.mxu0 0
    %1045 = vmatprep.subr.bf16.mxu0 0
    %1046 = vmatpush1.bf16.msra.mxu0 0
    %1047 = vmatprep.subr.bf16.mxu0 0
    %1048 = vmatpush1.bf16.msra.mxu0 0
    %1049 = vmatprep.subr.bf16.mxu0 0
    %1050 = vmatpush1.bf16.msra.mxu0 0
    %1051 = vmatprep.subr.bf16.mxu0 0
    %1052 = vmatpush1.bf16.msra.mxu0 0
    %1053 = vmatprep.mubr.bf16.mxu0 0
    %1054 = vmatmul.mubr.bf16.gmra.mrb[0].mxu0 %v1020
    %v1055 = vpop.f32.mrb[0].mxu0
    %v1056 = vadd.f32 0.0, %v1055
    %v1057 = vpop.f32.mrb[0].mxu0
    %v1058 = vpop.f32.mrb[0].mxu0
    %v1059 = vpop.f32.mrb[0].mxu0
    %1060 = vdwg.mxu0
    %v1061 = vadd.f32 %v1019, %v1056
    %v1062 = vtanh.pop %v1061
    %1063 = vst [vmem:[%s515] sm:$0xff] %v1062
    // Predicated region
    $region38: #{tpu_custom_call.1} parent=1 // pred_check
      _
    $region39: #{tpu_custom_call.1} parent=1 // pred_check_branch
      %1065 = sbr.rel (0) target = $region41
    $region40: #{tpu_custom_call.1} parent=1 // pred_region
      %s1067 = ssub.s32 1024, 1024
      %1068 = vsyncadd [#allocation5], %s1067
      %s1069 = sshll.u32 [#allocation11], 4
      %s1070 = int_to_ptr.vmem [resolvable:$true] %s1069
      %1075 = dma.vmem_to_hbm [thread:$0]  %s1070, 1024, %s5, [#allocation5], 128, 128, 8
    $region41: #{tpu_custom_call.1} parent=1 // pred_fallthru
      _
    // Predicated region
    $region42: #{tpu_custom_call.1} parent=1 // pred_check
      _
    $region43: #{tpu_custom_call.1} parent=1 // pred_check_branch
      %1077 = sbr.rel (0) target = $region45
    $region44: #{tpu_custom_call.1} parent=1 // pred_region
      %1078 = dma.done [#allocation5], 1024
    $region45: #{tpu_custom_call.1} parent=1 // pred_fallthru
      _
    %1079 = vsyncpa [#allocation4], 1
    %1080 = vsyncpa [#allocation7], 1
    %1081 = vsyncpa [#allocation10], 1
    %1082 = vsyncpa [#allocation5], 1

</llo_original>
